<compile_context>
chip_gen: v7x
topology: tpu7x:2x2x1
jax: 0.10.0
libtpu: 0.0.40
codegen_flags: <defaults>
</compile_context>

<pallas_src>
import functools

import jax
import jax.numpy as jnp
from jax.experimental import pallas as pl
from jax.experimental.pallas import tpu as pltpu


def mrconv_kernel(src_ref, dst_ref,            # scalar-prefetch (SMEM, full edge list)
                  x_ref, deg_ref, wt_ref, wb_ref, b_ref,   # VMEM inputs
                  o_ref,                       # VMEM output tile
                  acc_ref):                    # VMEM scratch (running max of x[src])
    i = pl.program_id(0)                       # node tile ("parallel")
    TN, _ = acc_ref.shape
    E_pad = dst_ref.shape[0]
    base = i * TN
    NEG = jnp.float32(-jnp.inf)

    # --- init running-max accumulator for this node tile ---------------------
    acc_ref[...] = jnp.full(acc_ref.shape, NEG, acc_ref.dtype)

    # --- scatter-max of gathered source features, one edge at a time ---------
    # Padded edges carry dst = -1 and are skipped by the in-tile test.
    def edge_body(e, carry):
        d = dst_ref[e]

        @pl.when(jnp.logical_and(d >= base, d < base + TN))
        def _update():
            s = src_ref[e]
            r = d - base
            xs = x_ref[pl.ds(s, 1), :]                                # (1, C_pad)
            acc_ref[pl.ds(r, 1), :] = jnp.maximum(acc_ref[pl.ds(r, 1), :], xs)

        return carry

    jax.lax.fori_loop(0, E_pad, edge_body, 0)

    # --- finalize: x_j = max_src - x (0 for isolated nodes) + MLP + ReLU -----
    row0 = pl.multiple_of(base, TN)
    x_tile = x_ref[pl.ds(row0, TN), :]                                # (TN, C_pad)
    x_j = jnp.where(deg_ref[...] > 0.0,
                    acc_ref[...] - x_tile,
                    jnp.float32(0.0))                                 # (TN, C_pad)
    y = (jnp.dot(x_tile, wt_ref[...],
                 precision=jax.lax.Precision.HIGHEST,
                 preferred_element_type=jnp.float32)
         + jnp.dot(x_j, wb_ref[...],
                   precision=jax.lax.Precision.HIGHEST,
                   preferred_element_type=jnp.float32)
         + b_ref[...])
    o_ref[...] = jnp.maximum(y, jnp.float32(0.0))


def _round_up(v, m):
    return (v + m - 1) // m * m


@functools.partial(jax.jit, static_argnames=("node_tile",))
def mrconv(x, edge_index, w, b, *, node_tile=512):
    N, C = x.shape
    two_c, c_out = w.shape
    assert two_c == 2 * C
    E = edge_index.shape[1]

    # --- padding: lane-dense features/outputs, sublane-aligned node tiles ----
    C_pad = _round_up(C, 128)
    Cout_pad = _round_up(c_out, 128)
    TN = min(_round_up(node_tile, 8), _round_up(N, 8))
    N_pad = _round_up(N, TN)
    E_pad = _round_up(max(E, 1), 8)

    x_p = jnp.zeros((N_pad, C_pad), jnp.float32).at[:N, :C].set(
        x.astype(jnp.float32))
    # Edge list as two flat int32 vectors (scalar-prefetched into SMEM).
    src = jnp.zeros((E_pad,), jnp.int32).at[:E].set(
        edge_index[0].astype(jnp.int32))
    dst = jnp.full((E_pad,), -1, jnp.int32).at[:E].set(
        edge_index[1].astype(jnp.int32))
    # Precomputed in-degree (has-incoming-edge) per node.
    deg = (jnp.zeros((N_pad,), jnp.float32)
           .at[edge_index[1]].add(1.0)).reshape(N_pad, 1)
    # Split weight: y = x @ W[:C] + x_j @ W[C:] + b  (no concat in-kernel).
    w = w.astype(jnp.float32)
    w_top = jnp.zeros((C_pad, Cout_pad), jnp.float32).at[:C, :c_out].set(w[:C])
    w_bot = jnp.zeros((C_pad, Cout_pad), jnp.float32).at[:C, :c_out].set(w[C:])
    b_p = jnp.zeros((1, Cout_pad), jnp.float32).at[:, :c_out].set(
        b.astype(jnp.float32).reshape(1, c_out))

    grid = (N_pad // TN,)

    out = pl.pallas_call(
        mrconv_kernel,
        out_shape=jax.ShapeDtypeStruct((N_pad, Cout_pad), jnp.float32),
        grid_spec=pltpu.PrefetchScalarGridSpec(
            num_scalar_prefetch=2,          # src, dst edge lists -> SMEM
            grid=grid,
            in_specs=[
                pl.BlockSpec((N_pad, C_pad), lambda i, s, d: (0, 0)),     # full x (resident)
                pl.BlockSpec((TN, 1), lambda i, s, d: (i, 0)),            # in-degree tile
                pl.BlockSpec((C_pad, Cout_pad), lambda i, s, d: (0, 0)),  # W[:C]
                pl.BlockSpec((C_pad, Cout_pad), lambda i, s, d: (0, 0)),  # W[C:]
                pl.BlockSpec((1, Cout_pad), lambda i, s, d: (0, 0)),      # bias
            ],
            out_specs=pl.BlockSpec((TN, Cout_pad), lambda i, s, d: (i, 0)),
            scratch_shapes=[pltpu.VMEM((TN, C_pad), jnp.float32)],        # running max
        ),
        compiler_params=pltpu.CompilerParams(
            dimension_semantics=("parallel",),
        ),
    )(src, dst, x_p, deg, w_top, w_bot, b_p)

    return out[:N, :c_out]


def mrconv_ref(x, edge_index, w, b):
    """Pure-JAX reference of the PyTorch forward."""
    src, dst = edge_index[0], edge_index[1]
    diff = x[src] - x[dst]
    N = x.shape[0]
    init = jnp.full((N, x.shape[1]), -jnp.inf, jnp.float32)
    x_j = init.at[dst].max(diff)
    has = jnp.zeros((N,), bool).at[dst].set(True)
    x_j = jnp.where(has[:, None], x_j, 0.0)
    h = jnp.concatenate([x, x_j], axis=1)
    y = jnp.dot(h, w, precision=jax.lax.Precision.HIGHEST) + b
    return jnp.maximum(y, 0.0)


if __name__ == "__main__":
    key = jax.random.PRNGKey(0)
    k_x, k_ei, k_w, k_b = jax.random.split(key, 4)

    N, C_in, C_out, E = 8, 4, 8, 16

    x = jax.random.normal(k_x, (N, C_in), dtype=jnp.float32)
    edge_index = jax.random.randint(k_ei, (2, E), 0, N, dtype=jnp.int32)

    # Deterministic parameter init for nn = MLP([2*C_in, C_out], 'relu', None, bias=True)
    w = (jax.random.normal(k_w, (2 * C_in, C_out), dtype=jnp.float32)
         * (1.0 / jnp.sqrt(2.0 * C_in)))
    b = jax.random.normal(k_b, (1, C_out), dtype=jnp.float32) * 0.01

    out = mrconv(x, edge_index, w, b)
    out = jax.block_until_ready(out)

    ref = mrconv_ref(x, edge_index, w, b)
    assert out.shape == (N, C_out)
    assert jnp.allclose(out, ref, atol=1e-4, rtol=1e-4), "mismatch vs reference"

    print("KERNEL_OK")
</pallas_src>

<mosaic_0001>
module attributes {stable_mosaic.version = 11 : i64} {
  func.func private @main(%arg0: i32) attributes {dimension_semantics = [#tpu.dimension_semantics<core_parallel>], iteration_bounds = array<i64: 2>, tpu.core_type = #tpu.core_type<sc_scalar_subcore>, window_params = []} {
    return
  }
}

module attributes {stable_mosaic.version = 11 : i64} {
  func.func private @main(%arg0: i32) attributes {dimension_semantics = [#tpu.dimension_semantics<core_parallel>], iteration_bounds = array<i64: 2>, tpu.core_type = #tpu.core_type<sc_scalar_subcore>, window_params = []} {
    return
  }
}

module attributes {stable_mosaic.version = 11 : i64} {
  func.func @mrconv_kernel(%arg0: i32, %arg1: memref<16xi32, #tpu.memory_space<smem>>, %arg2: memref<16xi32, #tpu.memory_space<smem>>, %arg3: memref<8x128xf32, #tpu.memory_space<vmem>>, %arg4: memref<8x1xf32, #tpu.memory_space<vmem>>, %arg5: memref<128x128xf32, #tpu.memory_space<vmem>>, %arg6: memref<128x128xf32, #tpu.memory_space<vmem>>, %arg7: memref<1x128xf32, #tpu.memory_space<vmem>>, %arg8: memref<8x128xf32, #tpu.memory_space<vmem>>, %arg9: memref<8x128xf32, #tpu.memory_space<vmem>>) attributes {dimension_semantics = [#tpu.dimension_semantics<parallel>], iteration_bounds = array<i64: 1>, scalar_prefetch = 2 : i64, scratch_operands = 1 : i64, tpu.core_type = #tpu.core_type<tc>, window_params = [{pipeline_mode = #tpu.pipeline_mode<synchronous>, transform_indices = @transform_0, window_bounds = array<i64: 8, 128>}, {transform_indices = @transform_1, window_bounds = array<i64: 8, 1>}, {pipeline_mode = #tpu.pipeline_mode<synchronous>, transform_indices = @transform_2, window_bounds = array<i64: 128, 128>}, {pipeline_mode = #tpu.pipeline_mode<synchronous>, transform_indices = @transform_3, window_bounds = array<i64: 128, 128>}, {pipeline_mode = #tpu.pipeline_mode<synchronous>, transform_indices = @transform_4, window_bounds = array<i64: 1, 128>}, {transform_indices = @transform_5, window_bounds = array<i64: 8, 128>}]} {
    %c8_i32 = arith.constant 8 : i32
    %0 = arith.muli %arg0, %c8_i32 : i32
    %cst = arith.constant 0xFF800000 : f32
    %1 = vector.broadcast %cst : f32 to vector<8x128xf32>
    %c0 = arith.constant 0 : index
    %c0_0 = arith.constant 0 : index
    %2 = vector.load %arg9[%c0, %c0_0] : memref<8x128xf32, #tpu.memory_space<vmem>>, vector<8x128xf32>
    tpu.vector_store %arg9[%c0, %c0_0], %1 {strides = array<i32>} : memref<8x128xf32, #tpu.memory_space<vmem>>, vector<8x128xf32>,
    %c0_i32 = arith.constant 0 : i32
    %c16_i32 = arith.constant 16 : i32
    %3 = arith.addi %c0_i32, %c16_i32 : i32
    %c1_i32 = arith.constant 1 : i32
    scf.for %arg10 = %c0_i32 to %3 step %c1_i32  : i32 {
      %27 = arith.index_cast %arg10 : i32 to index
      %28 = memref.load %arg2[%27] : memref<16xi32, #tpu.memory_space<smem>>
      %29 = arith.cmpi sge, %28, %0 : i32
      %c8_i32_20 = arith.constant 8 : i32
      %30 = arith.addi %0, %c8_i32_20 : i32
      %31 = arith.cmpi slt, %28, %30 : i32
      %32 = arith.andi %29, %31 : i1
      %33 = arith.extui %32 : i1 to i32
      %c0_i32_21 = arith.constant 0 : i32
      %34 = arith.cmpi ne, %33, %c0_i32_21 : i32
      scf.if %34 {
        %35 = arith.index_cast %arg10 : i32 to index
        %36 = memref.load %arg1[%35] : memref<16xi32, #tpu.memory_space<smem>>
        %37 = arith.subi %28, %0 : i32
        %38 = arith.index_cast %36 : i32 to index
        %c0_22 = arith.constant 0 : index
        %39 = vector.load %arg3[%38, %c0_22] : memref<8x128xf32, #tpu.memory_space<vmem>>, vector<1x128xf32>
        %40 = arith.index_cast %37 : i32 to index
        %c0_23 = arith.constant 0 : index
        %41 = vector.load %arg9[%40, %c0_23] : memref<8x128xf32, #tpu.memory_space<vmem>>, vector<1x128xf32>
        %42 = arith.maximumf %41, %39 : vector<1x128xf32>
        %43 = arith.index_cast %37 : i32 to index
        %c0_24 = arith.constant 0 : index
        %44 = vector.load %arg9[%43, %c0_24] : memref<8x128xf32, #tpu.memory_space<vmem>>, vector<1x128xf32>
        tpu.vector_store %arg9[%43, %c0_24], %42 {strides = array<i32>} : memref<8x128xf32, #tpu.memory_space<vmem>>, vector<1x128xf32>,
      } else {
      }
    }
    %c16_i32_1 = arith.constant 16 : i32
    %4 = tpu.assume_multiple %0, 8 : i32
    %5 = arith.index_cast %4 : i32 to index
    %c0_2 = arith.constant 0 : index
    %6 = vector.load %arg3[%5, %c0_2] : memref<8x128xf32, #tpu.memory_space<vmem>>, vector<8x128xf32>
    %c0_3 = arith.constant 0 : index
    %c0_4 = arith.constant 0 : index
    %7 = vector.load %arg4[%c0_3, %c0_4] : memref<8x1xf32, #tpu.memory_space<vmem>>, vector<8x1xf32>
    %cst_5 = arith.constant 0.000000e+00 : f32
    %8 = vector.broadcast %cst_5 : f32 to vector<8x1xf32>
    %9 = arith.cmpf ogt, %7, %8 : vector<8x1xf32>
    %c0_6 = arith.constant 0 : index
    %c0_7 = arith.constant 0 : index
    %10 = vector.load %arg9[%c0_6, %c0_7] : memref<8x128xf32, #tpu.memory_space<vmem>>, vector<8x128xf32>
    %11 = arith.subf %10, %6 : vector<8x128xf32>
    %cst_8 = arith.constant 0.000000e+00 : f32
    %12 = vector.shape_cast %9 : vector<8x1xi1> to vector<8x1xi1>
    %13 = vector.broadcast %12 : vector<8x1xi1> to vector<8x128xi1>
    %14 = vector.broadcast %cst_8 : f32 to vector<8x128xf32>
    %15 = arith.select %13, %11, %14 : vector<8x128xi1>, vector<8x128xf32>
    %c0_9 = arith.constant 0 : index
    %c0_10 = arith.constant 0 : index
    %16 = vector.load %arg5[%c0_9, %c0_10] : memref<128x128xf32, #tpu.memory_space<vmem>>, vector<128x128xf32>
    %cst_11 = arith.constant dense<0.000000e+00> : vector<8x128xf32>
    %17 = tpu.matmul %6, %16, %cst_11 {dimension_numbers = #tpu.dot_dimension_numbers<[1], [0], [0], [1], [0, 0, 1, 1], [], []>, precision = #tpu.contract_precision<fp32>} : vector<8x128xf32>, vector<128x128xf32>, vector<8x128xf32> -> vector<8x128xf32>
    %c0_12 = arith.constant 0 : index
    %c0_13 = arith.constant 0 : index
    %18 = vector.load %arg6[%c0_12, %c0_13] : memref<128x128xf32, #tpu.memory_space<vmem>>, vector<128x128xf32>
    %cst_14 = arith.constant dense<0.000000e+00> : vector<8x128xf32>
    %19 = tpu.matmul %15, %18, %cst_14 {dimension_numbers = #tpu.dot_dimension_numbers<[1], [0], [0], [1], [0, 0, 1, 1], [], []>, precision = #tpu.contract_precision<fp32>} : vector<8x128xf32>, vector<128x128xf32>, vector<8x128xf32> -> vector<8x128xf32>
    %20 = arith.addf %17, %19 : vector<8x128xf32>
    %c0_15 = arith.constant 0 : index
    %c0_16 = arith.constant 0 : index
    %21 = vector.load %arg7[%c0_15, %c0_16] : memref<1x128xf32, #tpu.memory_space<vmem>>, vector<1x128xf32>
    %22 = vector.broadcast %21 : vector<1x128xf32> to vector<8x128xf32>
    %23 = arith.addf %20, %22 : vector<8x128xf32>
    %cst_17 = arith.constant 0.000000e+00 : f32
    %24 = vector.broadcast %cst_17 : f32 to vector<8x128xf32>
    %25 = arith.maximumf %23, %24 : vector<8x128xf32>
    %c0_18 = arith.constant 0 : index
    %c0_19 = arith.constant 0 : index
    %26 = vector.load %arg8[%c0_18, %c0_19] : memref<8x128xf32, #tpu.memory_space<vmem>>, vector<8x128xf32>
    tpu.vector_store %arg8[%c0_18, %c0_19], %25 {strides = array<i32>} : memref<8x128xf32, #tpu.memory_space<vmem>>, vector<8x128xf32>,
    return
  }
  func.func @transform_0(%arg0: i32, %arg1: memref<16xi32, #tpu.memory_space<smem>>, %arg2: memref<16xi32, #tpu.memory_space<smem>>) -> (i32, i32) {
    %c0_i32 = arith.constant 0 : i32
    %c0_i32_0 = arith.constant 0 : i32
    %c0_i32_1 = arith.constant 0 : i32
    return %c0_i32, %c0_i32_0 : i32, i32
  }
  func.func @transform_1(%arg0: i32, %arg1: memref<16xi32, #tpu.memory_space<smem>>, %arg2: memref<16xi32, #tpu.memory_space<smem>>) -> (i32, i32) {
    %c0_i32 = arith.constant 0 : i32
    %c0_i32_0 = arith.constant 0 : i32
    return %arg0, %c0_i32 : i32, i32
  }
  func.func @transform_2(%arg0: i32, %arg1: memref<16xi32, #tpu.memory_space<smem>>, %arg2: memref<16xi32, #tpu.memory_space<smem>>) -> (i32, i32) {
    %c0_i32 = arith.constant 0 : i32
    %c0_i32_0 = arith.constant 0 : i32
    %c0_i32_1 = arith.constant 0 : i32
    return %c0_i32, %c0_i32_0 : i32, i32
  }
  func.func @transform_3(%arg0: i32, %arg1: memref<16xi32, #tpu.memory_space<smem>>, %arg2: memref<16xi32, #tpu.memory_space<smem>>) -> (i32, i32) {
    %c0_i32 = arith.constant 0 : i32
    %c0_i32_0 = arith.constant 0 : i32
    %c0_i32_1 = arith.constant 0 : i32
    return %c0_i32, %c0_i32_0 : i32, i32
  }
  func.func @transform_4(%arg0: i32, %arg1: memref<16xi32, #tpu.memory_space<smem>>, %arg2: memref<16xi32, #tpu.memory_space<smem>>) -> (i32, i32) {
    %c0_i32 = arith.constant 0 : i32
    %c0_i32_0 = arith.constant 0 : i32
    %c0_i32_1 = arith.constant 0 : i32
    return %c0_i32, %c0_i32_0 : i32, i32
  }
  func.func @transform_5(%arg0: i32, %arg1: memref<16xi32, #tpu.memory_space<smem>>, %arg2: memref<16xi32, #tpu.memory_space<smem>>) -> (i32, i32) {
    %c0_i32 = arith.constant 0 : i32
    %c0_i32_0 = arith.constant 0 : i32
    return %arg0, %c0_i32 : i32, i32
  }
}

</mosaic_0001>

<llo_original>
// kernel: mrconv.1
$region0: #{mrconv.1}
  #allocation0 [shape = 'u32[]', space=smem, size = 0x4, offset = 0x4, fixed_abs, tag = 'smem constant byte address 0x4 - core index']
  #allocation1 [shape = 'u32[144,128]{1,0:T(1,128)}', space=vmem, size = 0x12000, scoped, tag = 'internal scratch']
  #allocation2 [shape = 'f32[8,128]{1,0:T(8,128)}', space=vmem, size = 0x1000, scoped, tag = 'scratch operand']
  #allocation3 [shape = 's32[1]{0}', space=sflag, size = 0x4, scoped, tag = 'scoped memory for mrconv.1']
  #allocation4 [shape = 'u8[512]{0}', space=smem, size = 0x200, scoped, tag = 'prefetched SMEM operand 0']
  #allocation5 [shape = 'u8[512]{0}', space=smem, size = 0x200, scoped, tag = 'prefetched SMEM operand 1']
  %s0 = inlined_call_operand.vmem [shape: s32[16], index: 0, kind: input, shape index: {}]
  %s1 = inlined_call_operand.vmem [shape: s32[16], index: 1, kind: input, shape index: {}]
  %s2 = inlined_call_operand.vmem [shape: f32[8,128], index: 2, kind: input, shape index: {}]
  %s3 = inlined_call_operand.vmem [shape: f32[8,1], index: 3, kind: input, shape index: {}]
  %s4 = inlined_call_operand.vmem [shape: f32[128,128], index: 4, kind: input, shape index: {}]
  %s5 = inlined_call_operand.vmem [shape: f32[128,128], index: 5, kind: input, shape index: {}]
  %s6 = inlined_call_operand.vmem [shape: f32[1,128], index: 6, kind: input, shape index: {}]
  %s7 = inlined_call_operand.hbm [shape: f32[8,128], index: 7, kind: output, shape index: {}]
  %s8 = sld [smem:[#allocation0]]
  $region41: #{mrconv.1} parent=0
    _
  %s10 = ssub.s32 1, %s8
  %s11 = scalar_select 0, %s10, %s8
  %s12 = sshll.u32 %s0, 4
  %s13 = int_to_ptr.vmem [resolvable:$true] %s12
  %15 = dma.vmem_to_smem %s13, 16, [#allocation4], [#allocation3]
  %s16 = sshll.u32 %s1, 4
  %s17 = int_to_ptr.vmem [resolvable:$true] %s16
  %19 = dma.vmem_to_smem %s17, 16, [#allocation5], [#allocation3]
  %20 = dma.done [#allocation3], 32
  %21 = sfence
  $region1: #{mrconv.1} parent=0
    #allocation6 [shape = 'u8[4096]{0}', space=vmem, size = 0x1000, scoped, tag = 'output window, operand 0, single buffered']
    #allocation7 [shape = 's32[1]{0}', space=sflag, size = 0x4, scoped, tag = 'scoped memory for mrconv.1']
    %22 = vsyncpa [#allocation7], 0
    // Predicated region
    $region2: #{mrconv.1} parent=1 // pred_check
      _
    $region3: #{mrconv.1} parent=1 // pred_check_branch
      %24 = sbr.rel (0) target = $region5
    $region4: #{mrconv.1} parent=1 // pred_region
      _
    $region5: #{mrconv.1} parent=1 // pred_fallthru
      _
    // Predicated region
    $region6: #{mrconv.1} parent=1 // pred_check
      _
    $region7: #{mrconv.1} parent=1 // pred_check_branch
      %26 = sbr.rel (0) target = $region9
    $region8: #{mrconv.1} parent=1 // pred_region
      _
    $region9: #{mrconv.1} parent=1 // pred_fallthru
      _
    // Predicated region
    $region10: #{mrconv.1} parent=1 // pred_check
      _
    $region11: #{mrconv.1} parent=1 // pred_check_branch
      %28 = sbr.rel (0) target = $region13
    $region12: #{mrconv.1} parent=1 // pred_region
      _
    $region13: #{mrconv.1} parent=1 // pred_fallthru
      _
    // Predicated region
    $region14: #{mrconv.1} parent=1 // pred_check
      _
    $region15: #{mrconv.1} parent=1 // pred_check_branch
      %30 = sbr.rel (0) target = $region17
    $region16: #{mrconv.1} parent=1 // pred_region
      _
    $region17: #{mrconv.1} parent=1 // pred_fallthru
      _
    // Predicated region
    $region18: #{mrconv.1} parent=1 // pred_check
      _
    $region19: #{mrconv.1} parent=1 // pred_check_branch
      %32 = sbr.rel (0) target = $region21
    $region20: #{mrconv.1} parent=1 // pred_region
      _
    $region21: #{mrconv.1} parent=1 // pred_fallthru
      _
    %s33 = smul.u32 0, 8
    %34 = vst [vmem:[#allocation2] sm:$0xff] -inf
    loop: start=0, step=1, limit=16
    $region22: #{mrconv.1} parent=1 // loop_pre_header
      _
    $region23: #{mrconv.1} parent=1 // loop_header
      %s36 = sphi 0, %s40
      %p37 = scmp.ge.s32.totalorder %s36, 16
    $region24: #{mrconv.1} parent=1 // loop_header_branch
      %39 = sbr.rel (%p37) target = $region28
    $region25: #{mrconv.1} parent=1 // loop_body
      %s41 = sld [smem:[#allocation5 + %s36]]
      %p42 = scmp.ge.s32.totalorder %s41, %s33
      %s43 = sadd.s32 %s33, 8
      %p44 = scmp.lt.s32.totalorder %s41, %s43
      %p45 = pnand %p42, %p44
      %p46 = pneg %p45
      // Predicated region
      $region29: #{mrconv.1} parent=25 // pred_check
        _
      $region30: #{mrconv.1} parent=25 // pred_check_branch
        %48 = sbr.rel (%p45) target = $region32
      $region31: #{mrconv.1} parent=25 // pred_region
        %s49 = sld [smem:[#allocation4 + %s36]]
        %s50 = ssub.s32 %s41, %s33
        %s51 = scalar_lea.vmem %s2, %s49
        %v52 = vld [vmem:[%s51] sm:$0x1]
        %s53 = scalar_lea.vmem [#allocation2], %s50
        %v54 = vld [vmem:[%s53] sm:$0x1]
        %v55 = vmax.f32 %v54, %v52
        %56 = vst [vmem:[%s53] sm:$0x1] %v55
      $region32: #{mrconv.1} parent=25 // pred_fallthru
        _
    $region26: #{mrconv.1} parent=1 // loop_footer
      %s40 = sadd.s32 1, %s36
    $region27: #{mrconv.1} parent=1 // loop_footer_branch
      %35 = sbr.rel target = $region23
    $region28: #{mrconv.1} parent=1 // loop_exit
      _
    %s57 = scalar_lea.vmem %s2, %s33
    %v58 = vld [vmem:[%s57] sm:$0xff]
    %v59 = vld [vmem:[%s3] sm:$0xff]
    %vm60 = vcmp.gt.f32.partialorder %v59, 0.0
    %v61 = vld [vmem:[#allocation2] sm:$0xff]
    %v62 = vsub.f32 %v61, %v58
    %v63 = vsel %vm60, 1, 0
    %64 = vset.pattern.permute.xlu0 0
    %65 = vperm.xlu0 %64, %v63
    %v66 = vpop.permute.xlu0 %65
    %vm67 = vcmp.eq.s32.totalorder %v66, 1
    %v68 = vsel %vm67, %v62, 0.0
    %v69 = vld [vmem:[%s4] sm:$0xff]
    %v70 = vld [vmem:[%s4 + $0x8] sm:$0xff]
    %v71 = vld [vmem:[%s4 + $0x10] sm:$0xff]
    %v72 = vld [vmem:[%s4 + $0x18] sm:$0xff]
    %v73 = vld [vmem:[%s4 + $0x20] sm:$0xff]
    %v74 = vld [vmem:[%s4 + $0x28] sm:$0xff]
    %v75 = vld [vmem:[%s4 + $0x30] sm:$0xff]
    %v76 = vld [vmem:[%s4 + $0x38] sm:$0xff]
    %v77 = vld [vmem:[%s4 + $0x40] sm:$0xff]
    %v78 = vld [vmem:[%s4 + $0x48] sm:$0xff]
    %v79 = vld [vmem:[%s4 + $0x50] sm:$0xff]
    %v80 = vld [vmem:[%s4 + $0x58] sm:$0xff]
    %v81 = vld [vmem:[%s4 + $0x60] sm:$0xff]
    %v82 = vld [vmem:[%s4 + $0x68] sm:$0xff]
    %v83 = vld [vmem:[%s4 + $0x70] sm:$0xff]
    %v84 = vld [vmem:[%s4 + $0x78] sm:$0xff]
    %v85 = vld [vmem:[%s5] sm:$0xff]
    %v86 = vld [vmem:[%s5 + $0x8] sm:$0xff]
    %v87 = vld [vmem:[%s5 + $0x10] sm:$0xff]
    %v88 = vld [vmem:[%s5 + $0x18] sm:$0xff]
    %v89 = vld [vmem:[%s5 + $0x20] sm:$0xff]
    %v90 = vld [vmem:[%s5 + $0x28] sm:$0xff]
    %v91 = vld [vmem:[%s5 + $0x30] sm:$0xff]
    %v92 = vld [vmem:[%s5 + $0x38] sm:$0xff]
    %v93 = vld [vmem:[%s5 + $0x40] sm:$0xff]
    %v94 = vld [vmem:[%s5 + $0x48] sm:$0xff]
    %v95 = vld [vmem:[%s5 + $0x50] sm:$0xff]
    %v96 = vld [vmem:[%s5 + $0x58] sm:$0xff]
    %v97 = vld [vmem:[%s5 + $0x60] sm:$0xff]
    %v98 = vld [vmem:[%s5 + $0x68] sm:$0xff]
    %v99 = vld [vmem:[%s5 + $0x70] sm:$0xff]
    %v100 = vld [vmem:[%s5 + $0x78] sm:$0xff]
    %101 = vmatprep.subr.mxu0 0.0
    %v102 = vand.u32 %v85, 4294901760
    %103 = vmatpush1.msra.mxu0 %v102
    %104 = vmatprep.subr.mxu0 0.0
    %v105 = vand.u32 %v86, 4294901760
    %106 = vmatpush1.msra.mxu0 %v105
    %107 = vmatprep.subr.mxu0 0.0
    %v108 = vand.u32 %v87, 4294901760
    %109 = vmatpush1.msra.mxu0 %v108
    %110 = vmatprep.subr.mxu0 0.0
    %v111 = vand.u32 %v88, 4294901760
    %112 = vmatpush1.msra.mxu0 %v111
    %113 = vmatprep.subr.mxu0 0.0
    %v114 = vand.u32 %v89, 4294901760
    %115 = vmatpush1.msra.mxu0 %v114
    %116 = vmatprep.subr.mxu0 0.0
    %v117 = vand.u32 %v90, 4294901760
    %118 = vmatpush1.msra.mxu0 %v117
    %119 = vmatprep.subr.mxu0 0.0
    %v120 = vand.u32 %v91, 4294901760
    %121 = vmatpush1.msra.mxu0 %v120
    %122 = vmatprep.subr.mxu0 0.0
    %v123 = vand.u32 %v92, 4294901760
    %124 = vmatpush1.msra.mxu0 %v123
    %125 = vmatprep.subr.mxu0 0.0
    %v126 = vand.u32 %v93, 4294901760
    %127 = vmatpush1.msra.mxu0 %v126
    %128 = vmatprep.subr.mxu0 0.0
    %v129 = vand.u32 %v94, 4294901760
    %130 = vmatpush1.msra.mxu0 %v129
    %131 = vmatprep.subr.mxu0 0.0
    %v132 = vand.u32 %v95, 4294901760
    %133 = vmatpush1.msra.mxu0 %v132
    %134 = vmatprep.subr.mxu0 0.0
    %v135 = vand.u32 %v96, 4294901760
    %136 = vmatpush1.msra.mxu0 %v135
    %137 = vmatprep.subr.mxu0 0.0
    %v138 = vand.u32 %v97, 4294901760
    %139 = vmatpush1.msra.mxu0 %v138
    %140 = vmatprep.subr.mxu0 0.0
    %v141 = vand.u32 %v98, 4294901760
    %142 = vmatpush1.msra.mxu0 %v141
    %143 = vmatprep.subr.mxu0 0.0
    %v144 = vand.u32 %v99, 4294901760
    %145 = vmatpush1.msra.mxu0 %v144
    %146 = vmatprep.subr.mxu0 0.0
    %v147 = vand.u32 %v100, 4294901760
    %148 = vmatpush1.msra.mxu0 %v147
    %149 = vmatprep.subr.mxu0 0.0
    %150 = vmatpush1.msra.mxu0 0.0
    %151 = vmatprep.subr.mxu0 0.0
    %152 = vmatpush1.msra.mxu0 0.0
    %153 = vmatprep.subr.mxu0 0.0
    %154 = vmatpush1.msra.mxu0 0.0
    %155 = vmatprep.subr.mxu0 0.0
    %156 = vmatpush1.msra.mxu0 0.0
    %157 = vmatprep.subr.mxu0 0.0
    %158 = vmatpush1.msra.mxu0 0.0
    %159 = vmatprep.subr.mxu0 0.0
    %160 = vmatpush1.msra.mxu0 0.0
    %161 = vmatprep.subr.mxu0 0.0
    %162 = vmatpush1.msra.mxu0 0.0
    %163 = vmatprep.subr.mxu0 0.0
    %164 = vmatpush1.msra.mxu0 0.0
    %165 = vmatprep.subr.mxu0 0.0
    %166 = vmatpush1.msra.mxu0 0.0
    %167 = vmatprep.subr.mxu0 0.0
    %168 = vmatpush1.msra.mxu0 0.0
    %169 = vmatprep.subr.mxu0 0.0
    %170 = vmatpush1.msra.mxu0 0.0
    %171 = vmatprep.subr.mxu0 0.0
    %172 = vmatpush1.msra.mxu0 0.0
    %173 = vmatprep.subr.mxu0 0.0
    %174 = vmatpush1.msra.mxu0 0.0
    %175 = vmatprep.subr.mxu0 0.0
    %176 = vmatpush1.msra.mxu0 0.0
    %177 = vmatprep.subr.mxu0 0.0
    %178 = vmatpush1.msra.mxu0 0.0
    %179 = vmatprep.subr.mxu0 0.0
    %180 = vmatpush1.msra.mxu0 0.0
    %181 = vmatprep.mubr.f32.mxu0 0.0
    %v182 = vand.u32 %v68, 4294901760
    %v183 = vsub.f32 %v68, %v182
    %v184 = vand.u32 %v183, 4294901760
    %v185 = vsub.f32 %v183, %v184
    %v186 = vand.u32 %v185, 4294901760
    %187 = vmatmul.mubr.f32.gmra.mrb[0].mxu0 %v186
    %v188 = vpop.f32.mrb[0].mxu0
    %v189 = vadd.f32 0.0, %v188
    %v190 = vpop.f32.mrb[0].mxu0
    %191 = vdwg.mxu0
    %192 = vmatprep.subr.mxu0 0.0
    %v193 = vand.u32 %v85, 4294901760
    %v194 = vsub.f32 %v85, %v193
    %v195 = vand.u32 %v194, 4294901760
    %v196 = vsub.f32 %v194, %v195
    %v197 = vand.u32 %v196, 4294901760
    %198 = vmatpush1.msra.mxu0 %v197
    %199 = vmatprep.subr.mxu0 0.0
    %v200 = vand.u32 %v86, 4294901760
    %v201 = vsub.f32 %v86, %v200
    %v202 = vand.u32 %v201, 4294901760
    %v203 = vsub.f32 %v201, %v202
    %v204 = vand.u32 %v203, 4294901760
    %205 = vmatpush1.msra.mxu0 %v204
    %206 = vmatprep.subr.mxu0 0.0
    %v207 = vand.u32 %v87, 4294901760
    %v208 = vsub.f32 %v87, %v207
    %v209 = vand.u32 %v208, 4294901760
    %v210 = vsub.f32 %v208, %v209
    %v211 = vand.u32 %v210, 4294901760
    %212 = vmatpush1.msra.mxu0 %v211
    %213 = vmatprep.subr.mxu0 0.0
    %v214 = vand.u32 %v88, 4294901760
    %v215 = vsub.f32 %v88, %v214
    %v216 = vand.u32 %v215, 4294901760
    %v217 = vsub.f32 %v215, %v216
    %v218 = vand.u32 %v217, 4294901760
    %219 = vmatpush1.msra.mxu0 %v218
    %220 = vmatprep.subr.mxu0 0.0
    %v221 = vand.u32 %v89, 4294901760
    %v222 = vsub.f32 %v89, %v221
    %v223 = vand.u32 %v222, 4294901760
    %v224 = vsub.f32 %v222, %v223
    %v225 = vand.u32 %v224, 4294901760
    %226 = vmatpush1.msra.mxu0 %v225
    %227 = vmatprep.subr.mxu0 0.0
    %v228 = vand.u32 %v90, 4294901760
    %v229 = vsub.f32 %v90, %v228
    %v230 = vand.u32 %v229, 4294901760
    %v231 = vsub.f32 %v229, %v230
    %v232 = vand.u32 %v231, 4294901760
    %233 = vmatpush1.msra.mxu0 %v232
    %234 = vmatprep.subr.mxu0 0.0
    %v235 = vand.u32 %v91, 4294901760
    %v236 = vsub.f32 %v91, %v235
    %v237 = vand.u32 %v236, 4294901760
    %v238 = vsub.f32 %v236, %v237
    %v239 = vand.u32 %v238, 4294901760
    %240 = vmatpush1.msra.mxu0 %v239
    %241 = vmatprep.subr.mxu0 0.0
    %v242 = vand.u32 %v92, 4294901760
    %v243 = vsub.f32 %v92, %v242
    %v244 = vand.u32 %v243, 4294901760
    %v245 = vsub.f32 %v243, %v244
    %v246 = vand.u32 %v245, 4294901760
    %247 = vmatpush1.msra.mxu0 %v246
    %248 = vmatprep.subr.mxu0 0.0
    %v249 = vand.u32 %v93, 4294901760
    %v250 = vsub.f32 %v93, %v249
    %v251 = vand.u32 %v250, 4294901760
    %v252 = vsub.f32 %v250, %v251
    %v253 = vand.u32 %v252, 4294901760
    %254 = vmatpush1.msra.mxu0 %v253
    %255 = vmatprep.subr.mxu0 0.0
    %v256 = vand.u32 %v94, 4294901760
    %v257 = vsub.f32 %v94, %v256
    %v258 = vand.u32 %v257, 4294901760
    %v259 = vsub.f32 %v257, %v258
    %v260 = vand.u32 %v259, 4294901760
    %261 = vmatpush1.msra.mxu0 %v260
    %262 = vmatprep.subr.mxu0 0.0
    %v263 = vand.u32 %v95, 4294901760
    %v264 = vsub.f32 %v95, %v263
    %v265 = vand.u32 %v264, 4294901760
    %v266 = vsub.f32 %v264, %v265
    %v267 = vand.u32 %v266, 4294901760
    %268 = vmatpush1.msra.mxu0 %v267
    %269 = vmatprep.subr.mxu0 0.0
    %v270 = vand.u32 %v96, 4294901760
    %v271 = vsub.f32 %v96, %v270
    %v272 = vand.u32 %v271, 4294901760
    %v273 = vsub.f32 %v271, %v272
    %v274 = vand.u32 %v273, 4294901760
    %275 = vmatpush1.msra.mxu0 %v274
    %276 = vmatprep.subr.mxu0 0.0
    %v277 = vand.u32 %v97, 4294901760
    %v278 = vsub.f32 %v97, %v277
    %v279 = vand.u32 %v278, 4294901760
    %v280 = vsub.f32 %v278, %v279
    %v281 = vand.u32 %v280, 4294901760
    %282 = vmatpush1.msra.mxu0 %v281
    %283 = vmatprep.subr.mxu0 0.0
    %v284 = vand.u32 %v98, 4294901760
    %v285 = vsub.f32 %v98, %v284
    %v286 = vand.u32 %v285, 4294901760
    %v287 = vsub.f32 %v285, %v286
    %v288 = vand.u32 %v287, 4294901760
    %289 = vmatpush1.msra.mxu0 %v288
    %290 = vmatprep.subr.mxu0 0.0
    %v291 = vand.u32 %v99, 4294901760
    %v292 = vsub.f32 %v99, %v291
    %v293 = vand.u32 %v292, 4294901760
    %v294 = vsub.f32 %v292, %v293
    %v295 = vand.u32 %v294, 4294901760
    %296 = vmatpush1.msra.mxu0 %v295
    %297 = vmatprep.subr.mxu0 0.0
    %v298 = vand.u32 %v100, 4294901760
    %v299 = vsub.f32 %v100, %v298
    %v300 = vand.u32 %v299, 4294901760
    %v301 = vsub.f32 %v299, %v300
    %v302 = vand.u32 %v301, 4294901760
    %303 = vmatpush1.msra.mxu0 %v302
    %304 = vmatprep.subr.mxu0 0.0
    %305 = vmatpush1.msra.mxu0 0.0
    %306 = vmatprep.subr.mxu0 0.0
    %307 = vmatpush1.msra.mxu0 0.0
    %308 = vmatprep.subr.mxu0 0.0
    %309 = vmatpush1.msra.mxu0 0.0
    %310 = vmatprep.subr.mxu0 0.0
    %311 = vmatpush1.msra.mxu0 0.0
    %312 = vmatprep.subr.mxu0 0.0
    %313 = vmatpush1.msra.mxu0 0.0
    %314 = vmatprep.subr.mxu0 0.0
    %315 = vmatpush1.msra.mxu0 0.0
    %316 = vmatprep.subr.mxu0 0.0
    %317 = vmatpush1.msra.mxu0 0.0
    %318 = vmatprep.subr.mxu0 0.0
    %319 = vmatpush1.msra.mxu0 0.0
    %320 = vmatprep.subr.mxu0 0.0
    %321 = vmatpush1.msra.mxu0 0.0
    %322 = vmatprep.subr.mxu0 0.0
    %323 = vmatpush1.msra.mxu0 0.0
    %324 = vmatprep.subr.mxu0 0.0
    %325 = vmatpush1.msra.mxu0 0.0
    %326 = vmatprep.subr.mxu0 0.0
    %327 = vmatpush1.msra.mxu0 0.0
    %328 = vmatprep.subr.mxu0 0.0
    %329 = vmatpush1.msra.mxu0 0.0
    %330 = vmatprep.subr.mxu0 0.0
    %331 = vmatpush1.msra.mxu0 0.0
    %332 = vmatprep.subr.mxu0 0.0
    %333 = vmatpush1.msra.mxu0 0.0
    %334 = vmatprep.subr.mxu0 0.0
    %335 = vmatpush1.msra.mxu0 0.0
    %336 = vmatprep.mubr.f32.mxu0 0.0
    %v337 = vand.u32 %v68, 4294901760
    %338 = vmatmul.mubr.f32.gmra.mrb[0].mxu0 %v337
    %v339 = vpop.f32.mrb[0].mxu0
    %v340 = vadd.f32 %v189, %v339
    %v341 = vpop.f32.mrb[0].mxu0
    %342 = vdwg.mxu0
    %343 = vmatprep.subr.mxu0 0.0
    %v344 = vand.u32 %v85, 4294901760
    %v345 = vsub.f32 %v85, %v344
    %346 = vmatpush1.msra.mxu0 %v345
    %347 = vmatprep.subr.mxu0 0.0
    %v348 = vand.u32 %v86, 4294901760
    %v349 = vsub.f32 %v86, %v348
    %350 = vmatpush1.msra.mxu0 %v349
    %351 = vmatprep.subr.mxu0 0.0
    %v352 = vand.u32 %v87, 4294901760
    %v353 = vsub.f32 %v87, %v352
    %354 = vmatpush1.msra.mxu0 %v353
    %355 = vmatprep.subr.mxu0 0.0
    %v356 = vand.u32 %v88, 4294901760
    %v357 = vsub.f32 %v88, %v356
    %358 = vmatpush1.msra.mxu0 %v357
    %359 = vmatprep.subr.mxu0 0.0
    %v360 = vand.u32 %v89, 4294901760
    %v361 = vsub.f32 %v89, %v360
    %362 = vmatpush1.msra.mxu0 %v361
    %363 = vmatprep.subr.mxu0 0.0
    %v364 = vand.u32 %v90, 4294901760
    %v365 = vsub.f32 %v90, %v364
    %366 = vmatpush1.msra.mxu0 %v365
    %367 = vmatprep.subr.mxu0 0.0
    %v368 = vand.u32 %v91, 4294901760
    %v369 = vsub.f32 %v91, %v368
    %370 = vmatpush1.msra.mxu0 %v369
    %371 = vmatprep.subr.mxu0 0.0
    %v372 = vand.u32 %v92, 4294901760
    %v373 = vsub.f32 %v92, %v372
    %374 = vmatpush1.msra.mxu0 %v373
    %375 = vmatprep.subr.mxu0 0.0
    %v376 = vand.u32 %v93, 4294901760
    %v377 = vsub.f32 %v93, %v376
    %378 = vmatpush1.msra.mxu0 %v377
    %379 = vmatprep.subr.mxu0 0.0
    %v380 = vand.u32 %v94, 4294901760
    %v381 = vsub.f32 %v94, %v380
    %382 = vmatpush1.msra.mxu0 %v381
    %383 = vmatprep.subr.mxu0 0.0
    %v384 = vand.u32 %v95, 4294901760
    %v385 = vsub.f32 %v95, %v384
    %386 = vmatpush1.msra.mxu0 %v385
    %387 = vmatprep.subr.mxu0 0.0
    %v388 = vand.u32 %v96, 4294901760
    %v389 = vsub.f32 %v96, %v388
    %390 = vmatpush1.msra.mxu0 %v389
    %391 = vmatprep.subr.mxu0 0.0
    %v392 = vand.u32 %v97, 4294901760
    %v393 = vsub.f32 %v97, %v392
    %394 = vmatpush1.msra.mxu0 %v393
    %395 = vmatprep.subr.mxu0 0.0
    %v396 = vand.u32 %v98, 4294901760
    %v397 = vsub.f32 %v98, %v396
    %398 = vmatpush1.msra.mxu0 %v397
    %399 = vmatprep.subr.mxu0 0.0
    %v400 = vand.u32 %v99, 4294901760
    %v401 = vsub.f32 %v99, %v400
    %402 = vmatpush1.msra.mxu0 %v401
    %403 = vmatprep.subr.mxu0 0.0
    %v404 = vand.u32 %v100, 4294901760
    %v405 = vsub.f32 %v100, %v404
    %406 = vmatpush1.msra.mxu0 %v405
    %407 = vmatprep.subr.mxu0 0.0
    %408 = vmatpush1.msra.mxu0 0.0
    %409 = vmatprep.subr.mxu0 0.0
    %410 = vmatpush1.msra.mxu0 0.0
    %411 = vmatprep.subr.mxu0 0.0
    %412 = vmatpush1.msra.mxu0 0.0
    %413 = vmatprep.subr.mxu0 0.0
    %414 = vmatpush1.msra.mxu0 0.0
    %415 = vmatprep.subr.mxu0 0.0
    %416 = vmatpush1.msra.mxu0 0.0
    %417 = vmatprep.subr.mxu0 0.0
    %418 = vmatpush1.msra.mxu0 0.0
    %419 = vmatprep.subr.mxu0 0.0
    %420 = vmatpush1.msra.mxu0 0.0
    %421 = vmatprep.subr.mxu0 0.0
    %422 = vmatpush1.msra.mxu0 0.0
    %423 = vmatprep.subr.mxu0 0.0
    %424 = vmatpush1.msra.mxu0 0.0
    %425 = vmatprep.subr.mxu0 0.0
    %426 = vmatpush1.msra.mxu0 0.0
    %427 = vmatprep.subr.mxu0 0.0
    %428 = vmatpush1.msra.mxu0 0.0
    %429 = vmatprep.subr.mxu0 0.0
    %430 = vmatpush1.msra.mxu0 0.0
    %431 = vmatprep.subr.mxu0 0.0
    %432 = vmatpush1.msra.mxu0 0.0
    %433 = vmatprep.subr.mxu0 0.0
    %434 = vmatpush1.msra.mxu0 0.0
    %435 = vmatprep.subr.mxu0 0.0
    %436 = vmatpush1.msra.mxu0 0.0
    %437 = vmatprep.subr.mxu0 0.0
    %438 = vmatpush1.msra.mxu0 0.0
    %439 = vmatprep.mubr.f32.mxu0 0.0
    %v440 = vand.u32 %v68, 4294901760
    %v441 = vsub.f32 %v68, %v440
    %442 = vmatmul.mubr.f32.gmra.mrb[0].mxu0 %v441
    %v443 = vpop.f32.mrb[0].mxu0
    %v444 = vadd.f32 %v340, %v443
    %v445 = vpop.f32.mrb[0].mxu0
    %446 = vdwg.mxu0
    %447 = vmatprep.subr.mxu0 0.0
    %v448 = vand.u32 %v85, 4294901760
    %449 = vmatpush1.msra.mxu0 %v448
    %450 = vmatprep.subr.mxu0 0.0
    %v451 = vand.u32 %v86, 4294901760
    %452 = vmatpush1.msra.mxu0 %v451
    %453 = vmatprep.subr.mxu0 0.0
    %v454 = vand.u32 %v87, 4294901760
    %455 = vmatpush1.msra.mxu0 %v454
    %456 = vmatprep.subr.mxu0 0.0
    %v457 = vand.u32 %v88, 4294901760
    %458 = vmatpush1.msra.mxu0 %v457
    %459 = vmatprep.subr.mxu0 0.0
    %v460 = vand.u32 %v89, 4294901760
    %461 = vmatpush1.msra.mxu0 %v460
    %462 = vmatprep.subr.mxu0 0.0
    %v463 = vand.u32 %v90, 4294901760
    %464 = vmatpush1.msra.mxu0 %v463
    %465 = vmatprep.subr.mxu0 0.0
    %v466 = vand.u32 %v91, 4294901760
    %467 = vmatpush1.msra.mxu0 %v466
    %468 = vmatprep.subr.mxu0 0.0
    %v469 = vand.u32 %v92, 4294901760
    %470 = vmatpush1.msra.mxu0 %v469
    %471 = vmatprep.subr.mxu0 0.0
    %v472 = vand.u32 %v93, 4294901760
    %473 = vmatpush1.msra.mxu0 %v472
    %474 = vmatprep.subr.mxu0 0.0
    %v475 = vand.u32 %v94, 4294901760
    %476 = vmatpush1.msra.mxu0 %v475
    %477 = vmatprep.subr.mxu0 0.0
    %v478 = vand.u32 %v95, 4294901760
    %479 = vmatpush1.msra.mxu0 %v478
    %480 = vmatprep.subr.mxu0 0.0
    %v481 = vand.u32 %v96, 4294901760
    %482 = vmatpush1.msra.mxu0 %v481
    %483 = vmatprep.subr.mxu0 0.0
    %v484 = vand.u32 %v97, 4294901760
    %485 = vmatpush1.msra.mxu0 %v484
    %486 = vmatprep.subr.mxu0 0.0
    %v487 = vand.u32 %v98, 4294901760
    %488 = vmatpush1.msra.mxu0 %v487
    %489 = vmatprep.subr.mxu0 0.0
    %v490 = vand.u32 %v99, 4294901760
    %491 = vmatpush1.msra.mxu0 %v490
    %492 = vmatprep.subr.mxu0 0.0
    %v493 = vand.u32 %v100, 4294901760
    %494 = vmatpush1.msra.mxu0 %v493
    %495 = vmatprep.subr.mxu0 0.0
    %496 = vmatpush1.msra.mxu0 0.0
    %497 = vmatprep.subr.mxu0 0.0
    %498 = vmatpush1.msra.mxu0 0.0
    %499 = vmatprep.subr.mxu0 0.0
    %500 = vmatpush1.msra.mxu0 0.0
    %501 = vmatprep.subr.mxu0 0.0
    %502 = vmatpush1.msra.mxu0 0.0
    %503 = vmatprep.subr.mxu0 0.0
    %504 = vmatpush1.msra.mxu0 0.0
    %505 = vmatprep.subr.mxu0 0.0
    %506 = vmatpush1.msra.mxu0 0.0
    %507 = vmatprep.subr.mxu0 0.0
    %508 = vmatpush1.msra.mxu0 0.0
    %509 = vmatprep.subr.mxu0 0.0
    %510 = vmatpush1.msra.mxu0 0.0
    %511 = vmatprep.subr.mxu0 0.0
    %512 = vmatpush1.msra.mxu0 0.0
    %513 = vmatprep.subr.mxu0 0.0
    %514 = vmatpush1.msra.mxu0 0.0
    %515 = vmatprep.subr.mxu0 0.0
    %516 = vmatpush1.msra.mxu0 0.0
    %517 = vmatprep.subr.mxu0 0.0
    %518 = vmatpush1.msra.mxu0 0.0
    %519 = vmatprep.subr.mxu0 0.0
    %520 = vmatpush1.msra.mxu0 0.0
    %521 = vmatprep.subr.mxu0 0.0
    %522 = vmatpush1.msra.mxu0 0.0
    %523 = vmatprep.subr.mxu0 0.0
    %524 = vmatpush1.msra.mxu0 0.0
    %525 = vmatprep.subr.mxu0 0.0
    %526 = vmatpush1.msra.mxu0 0.0
    %527 = vmatprep.mubr.f32.mxu0 0.0
    %v528 = vand.u32 %v68, 4294901760
    %v529 = vsub.f32 %v68, %v528
    %v530 = vand.u32 %v529, 4294901760
    %531 = vmatmul.mubr.f32.gmra.mrb[0].mxu0 %v530
    %v532 = vpop.f32.mrb[0].mxu0
    %v533 = vadd.f32 %v444, %v532
    %v534 = vpop.f32.mrb[0].mxu0
    %535 = vdwg.mxu0
    %536 = vmatprep.subr.mxu0 0.0
    %v537 = vand.u32 %v85, 4294901760
    %v538 = vsub.f32 %v85, %v537
    %v539 = vand.u32 %v538, 4294901760
    %540 = vmatpush1.msra.mxu0 %v539
    %541 = vmatprep.subr.mxu0 0.0
    %v542 = vand.u32 %v86, 4294901760
    %v543 = vsub.f32 %v86, %v542
    %v544 = vand.u32 %v543, 4294901760
    %545 = vmatpush1.msra.mxu0 %v544
    %546 = vmatprep.subr.mxu0 0.0
    %v547 = vand.u32 %v87, 4294901760
    %v548 = vsub.f32 %v87, %v547
    %v549 = vand.u32 %v548, 4294901760
    %550 = vmatpush1.msra.mxu0 %v549
    %551 = vmatprep.subr.mxu0 0.0
    %v552 = vand.u32 %v88, 4294901760
    %v553 = vsub.f32 %v88, %v552
    %v554 = vand.u32 %v553, 4294901760
    %555 = vmatpush1.msra.mxu0 %v554
    %556 = vmatprep.subr.mxu0 0.0
    %v557 = vand.u32 %v89, 4294901760
    %v558 = vsub.f32 %v89, %v557
    %v559 = vand.u32 %v558, 4294901760
    %560 = vmatpush1.msra.mxu0 %v559
    %561 = vmatprep.subr.mxu0 0.0
    %v562 = vand.u32 %v90, 4294901760
    %v563 = vsub.f32 %v90, %v562
    %v564 = vand.u32 %v563, 4294901760
    %565 = vmatpush1.msra.mxu0 %v564
    %566 = vmatprep.subr.mxu0 0.0
    %v567 = vand.u32 %v91, 4294901760
    %v568 = vsub.f32 %v91, %v567
    %v569 = vand.u32 %v568, 4294901760
    %570 = vmatpush1.msra.mxu0 %v569
    %571 = vmatprep.subr.mxu0 0.0
    %v572 = vand.u32 %v92, 4294901760
    %v573 = vsub.f32 %v92, %v572
    %v574 = vand.u32 %v573, 4294901760
    %575 = vmatpush1.msra.mxu0 %v574
    %576 = vmatprep.subr.mxu0 0.0
    %v577 = vand.u32 %v93, 4294901760
    %v578 = vsub.f32 %v93, %v577
    %v579 = vand.u32 %v578, 4294901760
    %580 = vmatpush1.msra.mxu0 %v579
    %581 = vmatprep.subr.mxu0 0.0
    %v582 = vand.u32 %v94, 4294901760
    %v583 = vsub.f32 %v94, %v582
    %v584 = vand.u32 %v583, 4294901760
    %585 = vmatpush1.msra.mxu0 %v584
    %586 = vmatprep.subr.mxu0 0.0
    %v587 = vand.u32 %v95, 4294901760
    %v588 = vsub.f32 %v95, %v587
    %v589 = vand.u32 %v588, 4294901760
    %590 = vmatpush1.msra.mxu0 %v589
    %591 = vmatprep.subr.mxu0 0.0
    %v592 = vand.u32 %v96, 4294901760
    %v593 = vsub.f32 %v96, %v592
    %v594 = vand.u32 %v593, 4294901760
    %595 = vmatpush1.msra.mxu0 %v594
    %596 = vmatprep.subr.mxu0 0.0
    %v597 = vand.u32 %v97, 4294901760
    %v598 = vsub.f32 %v97, %v597
    %v599 = vand.u32 %v598, 4294901760
    %600 = vmatpush1.msra.mxu0 %v599
    %601 = vmatprep.subr.mxu0 0.0
    %v602 = vand.u32 %v98, 4294901760
    %v603 = vsub.f32 %v98, %v602
    %v604 = vand.u32 %v603, 4294901760
    %605 = vmatpush1.msra.mxu0 %v604
    %606 = vmatprep.subr.mxu0 0.0
    %v607 = vand.u32 %v99, 4294901760
    %v608 = vsub.f32 %v99, %v607
    %v609 = vand.u32 %v608, 4294901760
    %610 = vmatpush1.msra.mxu0 %v609
    %611 = vmatprep.subr.mxu0 0.0
    %v612 = vand.u32 %v100, 4294901760
    %v613 = vsub.f32 %v100, %v612
    %v614 = vand.u32 %v613, 4294901760
    %615 = vmatpush1.msra.mxu0 %v614
    %616 = vmatprep.subr.mxu0 0.0
    %617 = vmatpush1.msra.mxu0 0.0
    %618 = vmatprep.subr.mxu0 0.0
    %619 = vmatpush1.msra.mxu0 0.0
    %620 = vmatprep.subr.mxu0 0.0
    %621 = vmatpush1.msra.mxu0 0.0
    %622 = vmatprep.subr.mxu0 0.0
    %623 = vmatpush1.msra.mxu0 0.0
    %624 = vmatprep.subr.mxu0 0.0
    %625 = vmatpush1.msra.mxu0 0.0
    %626 = vmatprep.subr.mxu0 0.0
    %627 = vmatpush1.msra.mxu0 0.0
    %628 = vmatprep.subr.mxu0 0.0
    %629 = vmatpush1.msra.mxu0 0.0
    %630 = vmatprep.subr.mxu0 0.0
    %631 = vmatpush1.msra.mxu0 0.0
    %632 = vmatprep.subr.mxu0 0.0
    %633 = vmatpush1.msra.mxu0 0.0
    %634 = vmatprep.subr.mxu0 0.0
    %635 = vmatpush1.msra.mxu0 0.0
    %636 = vmatprep.subr.mxu0 0.0
    %637 = vmatpush1.msra.mxu0 0.0
    %638 = vmatprep.subr.mxu0 0.0
    %639 = vmatpush1.msra.mxu0 0.0
    %640 = vmatprep.subr.mxu0 0.0
    %641 = vmatpush1.msra.mxu0 0.0
    %642 = vmatprep.subr.mxu0 0.0
    %643 = vmatpush1.msra.mxu0 0.0
    %644 = vmatprep.subr.mxu0 0.0
    %645 = vmatpush1.msra.mxu0 0.0
    %646 = vmatprep.subr.mxu0 0.0
    %647 = vmatpush1.msra.mxu0 0.0
    %648 = vmatprep.mubr.f32.mxu0 0.0
    %v649 = vand.u32 %v68, 4294901760
    %650 = vmatmul.mubr.f32.gmra.mrb[0].mxu0 %v649
    %v651 = vpop.f32.mrb[0].mxu0
    %v652 = vadd.f32 %v533, %v651
    %v653 = vpop.f32.mrb[0].mxu0
    %654 = vdwg.mxu0
    %655 = vmatprep.subr.mxu0 0.0
    %v656 = vand.u32 %v85, 4294901760
    %657 = vmatpush1.msra.mxu0 %v656
    %658 = vmatprep.subr.mxu0 0.0
    %v659 = vand.u32 %v86, 4294901760
    %660 = vmatpush1.msra.mxu0 %v659
    %661 = vmatprep.subr.mxu0 0.0
    %v662 = vand.u32 %v87, 4294901760
    %663 = vmatpush1.msra.mxu0 %v662
    %664 = vmatprep.subr.mxu0 0.0
    %v665 = vand.u32 %v88, 4294901760
    %666 = vmatpush1.msra.mxu0 %v665
    %667 = vmatprep.subr.mxu0 0.0
    %v668 = vand.u32 %v89, 4294901760
    %669 = vmatpush1.msra.mxu0 %v668
    %670 = vmatprep.subr.mxu0 0.0
    %v671 = vand.u32 %v90, 4294901760
    %672 = vmatpush1.msra.mxu0 %v671
    %673 = vmatprep.subr.mxu0 0.0
    %v674 = vand.u32 %v91, 4294901760
    %675 = vmatpush1.msra.mxu0 %v674
    %676 = vmatprep.subr.mxu0 0.0
    %v677 = vand.u32 %v92, 4294901760
    %678 = vmatpush1.msra.mxu0 %v677
    %679 = vmatprep.subr.mxu0 0.0
    %v680 = vand.u32 %v93, 4294901760
    %681 = vmatpush1.msra.mxu0 %v680
    %682 = vmatprep.subr.mxu0 0.0
    %v683 = vand.u32 %v94, 4294901760
    %684 = vmatpush1.msra.mxu0 %v683
    %685 = vmatprep.subr.mxu0 0.0
    %v686 = vand.u32 %v95, 4294901760
    %687 = vmatpush1.msra.mxu0 %v686
    %688 = vmatprep.subr.mxu0 0.0
    %v689 = vand.u32 %v96, 4294901760
    %690 = vmatpush1.msra.mxu0 %v689
    %691 = vmatprep.subr.mxu0 0.0
    %v692 = vand.u32 %v97, 4294901760
    %693 = vmatpush1.msra.mxu0 %v692
    %694 = vmatprep.subr.mxu0 0.0
    %v695 = vand.u32 %v98, 4294901760
    %696 = vmatpush1.msra.mxu0 %v695
    %697 = vmatprep.subr.mxu0 0.0
    %v698 = vand.u32 %v99, 4294901760
    %699 = vmatpush1.msra.mxu0 %v698
    %700 = vmatprep.subr.mxu0 0.0
    %v701 = vand.u32 %v100, 4294901760
    %702 = vmatpush1.msra.mxu0 %v701
    %703 = vmatprep.subr.mxu0 0.0
    %704 = vmatpush1.msra.mxu0 0.0
    %705 = vmatprep.subr.mxu0 0.0
    %706 = vmatpush1.msra.mxu0 0.0
    %707 = vmatprep.subr.mxu0 0.0
    %708 = vmatpush1.msra.mxu0 0.0
    %709 = vmatprep.subr.mxu0 0.0
    %710 = vmatpush1.msra.mxu0 0.0
    %711 = vmatprep.subr.mxu0 0.0
    %712 = vmatpush1.msra.mxu0 0.0
    %713 = vmatprep.subr.mxu0 0.0
    %714 = vmatpush1.msra.mxu0 0.0
    %715 = vmatprep.subr.mxu0 0.0
    %716 = vmatpush1.msra.mxu0 0.0
    %717 = vmatprep.subr.mxu0 0.0
    %718 = vmatpush1.msra.mxu0 0.0
    %719 = vmatprep.subr.mxu0 0.0
    %720 = vmatpush1.msra.mxu0 0.0
    %721 = vmatprep.subr.mxu0 0.0
    %722 = vmatpush1.msra.mxu0 0.0
    %723 = vmatprep.subr.mxu0 0.0
    %724 = vmatpush1.msra.mxu0 0.0
    %725 = vmatprep.subr.mxu0 0.0
    %726 = vmatpush1.msra.mxu0 0.0
    %727 = vmatprep.subr.mxu0 0.0
    %728 = vmatpush1.msra.mxu0 0.0
    %729 = vmatprep.subr.mxu0 0.0
    %730 = vmatpush1.msra.mxu0 0.0
    %731 = vmatprep.subr.mxu0 0.0
    %732 = vmatpush1.msra.mxu0 0.0
    %733 = vmatprep.subr.mxu0 0.0
    %734 = vmatpush1.msra.mxu0 0.0
    %735 = vmatprep.mubr.f32.mxu0 0.0
    %v736 = vand.u32 %v68, 4294901760
    %737 = vmatmul.mubr.f32.gmra.mrb[0].mxu0 %v736
    %v738 = vpop.f32.mrb[0].mxu0
    %v739 = vadd.f32 %v652, %v738
    %v740 = vpop.f32.mrb[0].mxu0
    %741 = vdwg.mxu0
    %742 = vmatprep.subr.mxu0 0.0
    %v743 = vand.u32 %v69, 4294901760
    %744 = vmatpush1.msra.mxu0 %v743
    %745 = vmatprep.subr.mxu0 0.0
    %v746 = vand.u32 %v70, 4294901760
    %747 = vmatpush1.msra.mxu0 %v746
    %748 = vmatprep.subr.mxu0 0.0
    %v749 = vand.u32 %v71, 4294901760
    %750 = vmatpush1.msra.mxu0 %v749
    %751 = vmatprep.subr.mxu0 0.0
    %v752 = vand.u32 %v72, 4294901760
    %753 = vmatpush1.msra.mxu0 %v752
    %754 = vmatprep.subr.mxu0 0.0
    %v755 = vand.u32 %v73, 4294901760
    %756 = vmatpush1.msra.mxu0 %v755
    %757 = vmatprep.subr.mxu0 0.0
    %v758 = vand.u32 %v74, 4294901760
    %759 = vmatpush1.msra.mxu0 %v758
    %760 = vmatprep.subr.mxu0 0.0
    %v761 = vand.u32 %v75, 4294901760
    %762 = vmatpush1.msra.mxu0 %v761
    %763 = vmatprep.subr.mxu0 0.0
    %v764 = vand.u32 %v76, 4294901760
    %765 = vmatpush1.msra.mxu0 %v764
    %766 = vmatprep.subr.mxu0 0.0
    %v767 = vand.u32 %v77, 4294901760
    %768 = vmatpush1.msra.mxu0 %v767
    %769 = vmatprep.subr.mxu0 0.0
    %v770 = vand.u32 %v78, 4294901760
    %771 = vmatpush1.msra.mxu0 %v770
    %772 = vmatprep.subr.mxu0 0.0
    %v773 = vand.u32 %v79, 4294901760
    %774 = vmatpush1.msra.mxu0 %v773
    %775 = vmatprep.subr.mxu0 0.0
    %v776 = vand.u32 %v80, 4294901760
    %777 = vmatpush1.msra.mxu0 %v776
    %778 = vmatprep.subr.mxu0 0.0
    %v779 = vand.u32 %v81, 4294901760
    %780 = vmatpush1.msra.mxu0 %v779
    %781 = vmatprep.subr.mxu0 0.0
    %v782 = vand.u32 %v82, 4294901760
    %783 = vmatpush1.msra.mxu0 %v782
    %784 = vmatprep.subr.mxu0 0.0
    %v785 = vand.u32 %v83, 4294901760
    %786 = vmatpush1.msra.mxu0 %v785
    %787 = vmatprep.subr.mxu0 0.0
    %v788 = vand.u32 %v84, 4294901760
    %789 = vmatpush1.msra.mxu0 %v788
    %790 = vmatprep.subr.mxu0 0.0
    %791 = vmatpush1.msra.mxu0 0.0
    %792 = vmatprep.subr.mxu0 0.0
    %793 = vmatpush1.msra.mxu0 0.0
    %794 = vmatprep.subr.mxu0 0.0
    %795 = vmatpush1.msra.mxu0 0.0
    %796 = vmatprep.subr.mxu0 0.0
    %797 = vmatpush1.msra.mxu0 0.0
    %798 = vmatprep.subr.mxu0 0.0
    %799 = vmatpush1.msra.mxu0 0.0
    %800 = vmatprep.subr.mxu0 0.0
    %801 = vmatpush1.msra.mxu0 0.0
    %802 = vmatprep.subr.mxu0 0.0
    %803 = vmatpush1.msra.mxu0 0.0
    %804 = vmatprep.subr.mxu0 0.0
    %805 = vmatpush1.msra.mxu0 0.0
    %806 = vmatprep.subr.mxu0 0.0
    %807 = vmatpush1.msra.mxu0 0.0
    %808 = vmatprep.subr.mxu0 0.0
    %809 = vmatpush1.msra.mxu0 0.0
    %810 = vmatprep.subr.mxu0 0.0
    %811 = vmatpush1.msra.mxu0 0.0
    %812 = vmatprep.subr.mxu0 0.0
    %813 = vmatpush1.msra.mxu0 0.0
    %814 = vmatprep.subr.mxu0 0.0
    %815 = vmatpush1.msra.mxu0 0.0
    %816 = vmatprep.subr.mxu0 0.0
    %817 = vmatpush1.msra.mxu0 0.0
    %818 = vmatprep.subr.mxu0 0.0
    %819 = vmatpush1.msra.mxu0 0.0
    %820 = vmatprep.subr.mxu0 0.0
    %821 = vmatpush1.msra.mxu0 0.0
    %822 = vmatprep.mubr.f32.mxu0 0.0
    %v823 = vand.u32 %v58, 4294901760
    %v824 = vsub.f32 %v58, %v823
    %v825 = vand.u32 %v824, 4294901760
    %v826 = vsub.f32 %v824, %v825
    %v827 = vand.u32 %v826, 4294901760
    %828 = vmatmul.mubr.f32.gmra.mrb[0].mxu0 %v827
    %v829 = vpop.f32.mrb[0].mxu0
    %v830 = vadd.f32 %v739, %v829
    %v831 = vpop.f32.mrb[0].mxu0
    %832 = vdwg.mxu0
    %833 = vmatprep.subr.mxu0 0.0
    %v834 = vand.u32 %v69, 4294901760
    %v835 = vsub.f32 %v69, %v834
    %v836 = vand.u32 %v835, 4294901760
    %v837 = vsub.f32 %v835, %v836
    %v838 = vand.u32 %v837, 4294901760
    %839 = vmatpush1.msra.mxu0 %v838
    %840 = vmatprep.subr.mxu0 0.0
    %v841 = vand.u32 %v70, 4294901760
    %v842 = vsub.f32 %v70, %v841
    %v843 = vand.u32 %v842, 4294901760
    %v844 = vsub.f32 %v842, %v843
    %v845 = vand.u32 %v844, 4294901760
    %846 = vmatpush1.msra.mxu0 %v845
    %847 = vmatprep.subr.mxu0 0.0
    %v848 = vand.u32 %v71, 4294901760
    %v849 = vsub.f32 %v71, %v848
    %v850 = vand.u32 %v849, 4294901760
    %v851 = vsub.f32 %v849, %v850
    %v852 = vand.u32 %v851, 4294901760
    %853 = vmatpush1.msra.mxu0 %v852
    %854 = vmatprep.subr.mxu0 0.0
    %v855 = vand.u32 %v72, 4294901760
    %v856 = vsub.f32 %v72, %v855
    %v857 = vand.u32 %v856, 4294901760
    %v858 = vsub.f32 %v856, %v857
    %v859 = vand.u32 %v858, 4294901760
    %860 = vmatpush1.msra.mxu0 %v859
    %861 = vmatprep.subr.mxu0 0.0
    %v862 = vand.u32 %v73, 4294901760
    %v863 = vsub.f32 %v73, %v862
    %v864 = vand.u32 %v863, 4294901760
    %v865 = vsub.f32 %v863, %v864
    %v866 = vand.u32 %v865, 4294901760
    %867 = vmatpush1.msra.mxu0 %v866
    %868 = vmatprep.subr.mxu0 0.0
    %v869 = vand.u32 %v74, 4294901760
    %v870 = vsub.f32 %v74, %v869
    %v871 = vand.u32 %v870, 4294901760
    %v872 = vsub.f32 %v870, %v871
    %v873 = vand.u32 %v872, 4294901760
    %874 = vmatpush1.msra.mxu0 %v873
    %875 = vmatprep.subr.mxu0 0.0
    %v876 = vand.u32 %v75, 4294901760
    %v877 = vsub.f32 %v75, %v876
    %v878 = vand.u32 %v877, 4294901760
    %v879 = vsub.f32 %v877, %v878
    %v880 = vand.u32 %v879, 4294901760
    %881 = vmatpush1.msra.mxu0 %v880
    %882 = vmatprep.subr.mxu0 0.0
    %v883 = vand.u32 %v76, 4294901760
    %v884 = vsub.f32 %v76, %v883
    %v885 = vand.u32 %v884, 4294901760
    %v886 = vsub.f32 %v884, %v885
    %v887 = vand.u32 %v886, 4294901760
    %888 = vmatpush1.msra.mxu0 %v887
    %889 = vmatprep.subr.mxu0 0.0
    %v890 = vand.u32 %v77, 4294901760
    %v891 = vsub.f32 %v77, %v890
    %v892 = vand.u32 %v891, 4294901760
    %v893 = vsub.f32 %v891, %v892
    %v894 = vand.u32 %v893, 4294901760
    %895 = vmatpush1.msra.mxu0 %v894
    %896 = vmatprep.subr.mxu0 0.0
    %v897 = vand.u32 %v78, 4294901760
    %v898 = vsub.f32 %v78, %v897
    %v899 = vand.u32 %v898, 4294901760
    %v900 = vsub.f32 %v898, %v899
    %v901 = vand.u32 %v900, 4294901760
    %902 = vmatpush1.msra.mxu0 %v901
    %903 = vmatprep.subr.mxu0 0.0
    %v904 = vand.u32 %v79, 4294901760
    %v905 = vsub.f32 %v79, %v904
    %v906 = vand.u32 %v905, 4294901760
    %v907 = vsub.f32 %v905, %v906
    %v908 = vand.u32 %v907, 4294901760
    %909 = vmatpush1.msra.mxu0 %v908
    %910 = vmatprep.subr.mxu0 0.0
    %v911 = vand.u32 %v80, 4294901760
    %v912 = vsub.f32 %v80, %v911
    %v913 = vand.u32 %v912, 4294901760
    %v914 = vsub.f32 %v912, %v913
    %v915 = vand.u32 %v914, 4294901760
    %916 = vmatpush1.msra.mxu0 %v915
    %917 = vmatprep.subr.mxu0 0.0
    %v918 = vand.u32 %v81, 4294901760
    %v919 = vsub.f32 %v81, %v918
    %v920 = vand.u32 %v919, 4294901760
    %v921 = vsub.f32 %v919, %v920
    %v922 = vand.u32 %v921, 4294901760
    %923 = vmatpush1.msra.mxu0 %v922
    %924 = vmatprep.subr.mxu0 0.0
    %v925 = vand.u32 %v82, 4294901760
    %v926 = vsub.f32 %v82, %v925
    %v927 = vand.u32 %v926, 4294901760
    %v928 = vsub.f32 %v926, %v927
    %v929 = vand.u32 %v928, 4294901760
    %930 = vmatpush1.msra.mxu0 %v929
    %931 = vmatprep.subr.mxu0 0.0
    %v932 = vand.u32 %v83, 4294901760
    %v933 = vsub.f32 %v83, %v932
    %v934 = vand.u32 %v933, 4294901760
    %v935 = vsub.f32 %v933, %v934
    %v936 = vand.u32 %v935, 4294901760
    %937 = vmatpush1.msra.mxu0 %v936
    %938 = vmatprep.subr.mxu0 0.0
    %v939 = vand.u32 %v84, 4294901760
    %v940 = vsub.f32 %v84, %v939
    %v941 = vand.u32 %v940, 4294901760
    %v942 = vsub.f32 %v940, %v941
    %v943 = vand.u32 %v942, 4294901760
    %944 = vmatpush1.msra.mxu0 %v943
    %945 = vmatprep.subr.mxu0 0.0
    %946 = vmatpush1.msra.mxu0 0.0
    %947 = vmatprep.subr.mxu0 0.0
    %948 = vmatpush1.msra.mxu0 0.0
    %949 = vmatprep.subr.mxu0 0.0
    %950 = vmatpush1.msra.mxu0 0.0
    %951 = vmatprep.subr.mxu0 0.0
    %952 = vmatpush1.msra.mxu0 0.0
    %953 = vmatprep.subr.mxu0 0.0
    %954 = vmatpush1.msra.mxu0 0.0
    %955 = vmatprep.subr.mxu0 0.0
    %956 = vmatpush1.msra.mxu0 0.0
    %957 = vmatprep.subr.mxu0 0.0
    %958 = vmatpush1.msra.mxu0 0.0
    %959 = vmatprep.subr.mxu0 0.0
    %960 = vmatpush1.msra.mxu0 0.0
    %961 = vmatprep.subr.mxu0 0.0
    %962 = vmatpush1.msra.mxu0 0.0
    %963 = vmatprep.subr.mxu0 0.0
    %964 = vmatpush1.msra.mxu0 0.0
    %965 = vmatprep.subr.mxu0 0.0
    %966 = vmatpush1.msra.mxu0 0.0
    %967 = vmatprep.subr.mxu0 0.0
    %968 = vmatpush1.msra.mxu0 0.0
    %969 = vmatprep.subr.mxu0 0.0
    %970 = vmatpush1.msra.mxu0 0.0
    %971 = vmatprep.subr.mxu0 0.0
    %972 = vmatpush1.msra.mxu0 0.0
    %973 = vmatprep.subr.mxu0 0.0
    %974 = vmatpush1.msra.mxu0 0.0
    %975 = vmatprep.subr.mxu0 0.0
    %976 = vmatpush1.msra.mxu0 0.0
    %977 = vmatprep.mubr.f32.mxu0 0.0
    %v978 = vand.u32 %v58, 4294901760
    %979 = vmatmul.mubr.f32.gmra.mrb[0].mxu0 %v978
    %v980 = vpop.f32.mrb[0].mxu0
    %v981 = vadd.f32 %v830, %v980
    %v982 = vpop.f32.mrb[0].mxu0
    %983 = vdwg.mxu0
    %984 = vmatprep.subr.mxu0 0.0
    %v985 = vand.u32 %v69, 4294901760
    %v986 = vsub.f32 %v69, %v985
    %987 = vmatpush1.msra.mxu0 %v986
    %988 = vmatprep.subr.mxu0 0.0
    %v989 = vand.u32 %v70, 4294901760
    %v990 = vsub.f32 %v70, %v989
    %991 = vmatpush1.msra.mxu0 %v990
    %992 = vmatprep.subr.mxu0 0.0
    %v993 = vand.u32 %v71, 4294901760
    %v994 = vsub.f32 %v71, %v993
    %995 = vmatpush1.msra.mxu0 %v994
    %996 = vmatprep.subr.mxu0 0.0
    %v997 = vand.u32 %v72, 4294901760
    %v998 = vsub.f32 %v72, %v997
    %999 = vmatpush1.msra.mxu0 %v998
    %1000 = vmatprep.subr.mxu0 0.0
    %v1001 = vand.u32 %v73, 4294901760
    %v1002 = vsub.f32 %v73, %v1001
    %1003 = vmatpush1.msra.mxu0 %v1002
    %1004 = vmatprep.subr.mxu0 0.0
    %v1005 = vand.u32 %v74, 4294901760
    %v1006 = vsub.f32 %v74, %v1005
    %1007 = vmatpush1.msra.mxu0 %v1006
    %1008 = vmatprep.subr.mxu0 0.0
    %v1009 = vand.u32 %v75, 4294901760
    %v1010 = vsub.f32 %v75, %v1009
    %1011 = vmatpush1.msra.mxu0 %v1010
    %1012 = vmatprep.subr.mxu0 0.0
    %v1013 = vand.u32 %v76, 4294901760
    %v1014 = vsub.f32 %v76, %v1013
    %1015 = vmatpush1.msra.mxu0 %v1014
    %1016 = vmatprep.subr.mxu0 0.0
    %v1017 = vand.u32 %v77, 4294901760
    %v1018 = vsub.f32 %v77, %v1017
    %1019 = vmatpush1.msra.mxu0 %v1018
    %1020 = vmatprep.subr.mxu0 0.0
    %v1021 = vand.u32 %v78, 4294901760
    %v1022 = vsub.f32 %v78, %v1021
    %1023 = vmatpush1.msra.mxu0 %v1022
    %1024 = vmatprep.subr.mxu0 0.0
    %v1025 = vand.u32 %v79, 4294901760
    %v1026 = vsub.f32 %v79, %v1025
    %1027 = vmatpush1.msra.mxu0 %v1026
    %1028 = vmatprep.subr.mxu0 0.0
    %v1029 = vand.u32 %v80, 4294901760
    %v1030 = vsub.f32 %v80, %v1029
    %1031 = vmatpush1.msra.mxu0 %v1030
    %1032 = vmatprep.subr.mxu0 0.0
    %v1033 = vand.u32 %v81, 4294901760
    %v1034 = vsub.f32 %v81, %v1033
    %1035 = vmatpush1.msra.mxu0 %v1034
    %1036 = vmatprep.subr.mxu0 0.0
    %v1037 = vand.u32 %v82, 4294901760
    %v1038 = vsub.f32 %v82, %v1037
    %1039 = vmatpush1.msra.mxu0 %v1038
    %1040 = vmatprep.subr.mxu0 0.0
    %v1041 = vand.u32 %v83, 4294901760
    %v1042 = vsub.f32 %v83, %v1041
    %1043 = vmatpush1.msra.mxu0 %v1042
    %1044 = vmatprep.subr.mxu0 0.0
    %v1045 = vand.u32 %v84, 4294901760
    %v1046 = vsub.f32 %v84, %v1045
    %1047 = vmatpush1.msra.mxu0 %v1046
    %1048 = vmatprep.subr.mxu0 0.0
    %1049 = vmatpush1.msra.mxu0 0.0
    %1050 = vmatprep.subr.mxu0 0.0
    %1051 = vmatpush1.msra.mxu0 0.0
    %1052 = vmatprep.subr.mxu0 0.0
    %1053 = vmatpush1.msra.mxu0 0.0
    %1054 = vmatprep.subr.mxu0 0.0
    %1055 = vmatpush1.msra.mxu0 0.0
    %1056 = vmatprep.subr.mxu0 0.0
    %1057 = vmatpush1.msra.mxu0 0.0
    %1058 = vmatprep.subr.mxu0 0.0
    %1059 = vmatpush1.msra.mxu0 0.0
    %1060 = vmatprep.subr.mxu0 0.0
    %1061 = vmatpush1.msra.mxu0 0.0
    %1062 = vmatprep.subr.mxu0 0.0
    %1063 = vmatpush1.msra.mxu0 0.0
    %1064 = vmatprep.subr.mxu0 0.0
    %1065 = vmatpush1.msra.mxu0 0.0
    %1066 = vmatprep.subr.mxu0 0.0
    %1067 = vmatpush1.msra.mxu0 0.0
    %1068 = vmatprep.subr.mxu0 0.0
    %1069 = vmatpush1.msra.mxu0 0.0
    %1070 = vmatprep.subr.mxu0 0.0
    %1071 = vmatpush1.msra.mxu0 0.0
    %1072 = vmatprep.subr.mxu0 0.0
    %1073 = vmatpush1.msra.mxu0 0.0
    %1074 = vmatprep.subr.mxu0 0.0
    %1075 = vmatpush1.msra.mxu0 0.0
    %1076 = vmatprep.subr.mxu0 0.0
    %1077 = vmatpush1.msra.mxu0 0.0
    %1078 = vmatprep.subr.mxu0 0.0
    %1079 = vmatpush1.msra.mxu0 0.0
    %1080 = vmatprep.mubr.f32.mxu0 0.0
    %v1081 = vand.u32 %v58, 4294901760
    %v1082 = vsub.f32 %v58, %v1081
    %1083 = vmatmul.mubr.f32.gmra.mrb[0].mxu0 %v1082
    %v1084 = vpop.f32.mrb[0].mxu0
    %v1085 = vadd.f32 %v981, %v1084
    %v1086 = vpop.f32.mrb[0].mxu0
    %1087 = vdwg.mxu0
    %1088 = vmatprep.subr.mxu0 0.0
    %v1089 = vand.u32 %v69, 4294901760
    %1090 = vmatpush1.msra.mxu0 %v1089
    %1091 = vmatprep.subr.mxu0 0.0
    %v1092 = vand.u32 %v70, 4294901760
    %1093 = vmatpush1.msra.mxu0 %v1092
    %1094 = vmatprep.subr.mxu0 0.0
    %v1095 = vand.u32 %v71, 4294901760
    %1096 = vmatpush1.msra.mxu0 %v1095
    %1097 = vmatprep.subr.mxu0 0.0
    %v1098 = vand.u32 %v72, 4294901760
    %1099 = vmatpush1.msra.mxu0 %v1098
    %1100 = vmatprep.subr.mxu0 0.0
    %v1101 = vand.u32 %v73, 4294901760
    %1102 = vmatpush1.msra.mxu0 %v1101
    %1103 = vmatprep.subr.mxu0 0.0
    %v1104 = vand.u32 %v74, 4294901760
    %1105 = vmatpush1.msra.mxu0 %v1104
    %1106 = vmatprep.subr.mxu0 0.0
    %v1107 = vand.u32 %v75, 4294901760
    %1108 = vmatpush1.msra.mxu0 %v1107
    %1109 = vmatprep.subr.mxu0 0.0
    %v1110 = vand.u32 %v76, 4294901760
    %1111 = vmatpush1.msra.mxu0 %v1110
    %1112 = vmatprep.subr.mxu0 0.0
    %v1113 = vand.u32 %v77, 4294901760
    %1114 = vmatpush1.msra.mxu0 %v1113
    %1115 = vmatprep.subr.mxu0 0.0
    %v1116 = vand.u32 %v78, 4294901760
    %1117 = vmatpush1.msra.mxu0 %v1116
    %1118 = vmatprep.subr.mxu0 0.0
    %v1119 = vand.u32 %v79, 4294901760
    %1120 = vmatpush1.msra.mxu0 %v1119
    %1121 = vmatprep.subr.mxu0 0.0
    %v1122 = vand.u32 %v80, 4294901760
    %1123 = vmatpush1.msra.mxu0 %v1122
    %1124 = vmatprep.subr.mxu0 0.0
    %v1125 = vand.u32 %v81, 4294901760
    %1126 = vmatpush1.msra.mxu0 %v1125
    %1127 = vmatprep.subr.mxu0 0.0
    %v1128 = vand.u32 %v82, 4294901760
    %1129 = vmatpush1.msra.mxu0 %v1128
    %1130 = vmatprep.subr.mxu0 0.0
    %v1131 = vand.u32 %v83, 4294901760
    %1132 = vmatpush1.msra.mxu0 %v1131
    %1133 = vmatprep.subr.mxu0 0.0
    %v1134 = vand.u32 %v84, 4294901760
    %1135 = vmatpush1.msra.mxu0 %v1134
    %1136 = vmatprep.subr.mxu0 0.0
    %1137 = vmatpush1.msra.mxu0 0.0
    %1138 = vmatprep.subr.mxu0 0.0
    %1139 = vmatpush1.msra.mxu0 0.0
    %1140 = vmatprep.subr.mxu0 0.0
    %1141 = vmatpush1.msra.mxu0 0.0
    %1142 = vmatprep.subr.mxu0 0.0
    %1143 = vmatpush1.msra.mxu0 0.0
    %1144 = vmatprep.subr.mxu0 0.0
    %1145 = vmatpush1.msra.mxu0 0.0
    %1146 = vmatprep.subr.mxu0 0.0
    %1147 = vmatpush1.msra.mxu0 0.0
    %1148 = vmatprep.subr.mxu0 0.0
    %1149 = vmatpush1.msra.mxu0 0.0
    %1150 = vmatprep.subr.mxu0 0.0
    %1151 = vmatpush1.msra.mxu0 0.0
    %1152 = vmatprep.subr.mxu0 0.0
    %1153 = vmatpush1.msra.mxu0 0.0
    %1154 = vmatprep.subr.mxu0 0.0
    %1155 = vmatpush1.msra.mxu0 0.0
    %1156 = vmatprep.subr.mxu0 0.0
    %1157 = vmatpush1.msra.mxu0 0.0
    %1158 = vmatprep.subr.mxu0 0.0
    %1159 = vmatpush1.msra.mxu0 0.0
    %1160 = vmatprep.subr.mxu0 0.0
    %1161 = vmatpush1.msra.mxu0 0.0
    %1162 = vmatprep.subr.mxu0 0.0
    %1163 = vmatpush1.msra.mxu0 0.0
    %1164 = vmatprep.subr.mxu0 0.0
    %1165 = vmatpush1.msra.mxu0 0.0
    %1166 = vmatprep.subr.mxu0 0.0
    %1167 = vmatpush1.msra.mxu0 0.0
    %1168 = vmatprep.mubr.f32.mxu0 0.0
    %v1169 = vand.u32 %v58, 4294901760
    %v1170 = vsub.f32 %v58, %v1169
    %v1171 = vand.u32 %v1170, 4294901760
    %1172 = vmatmul.mubr.f32.gmra.mrb[0].mxu0 %v1171
    %v1173 = vpop.f32.mrb[0].mxu0
    %v1174 = vadd.f32 %v1085, %v1173
    %v1175 = vpop.f32.mrb[0].mxu0
    %1176 = vdwg.mxu0
    %1177 = vmatprep.subr.mxu0 0.0
    %v1178 = vand.u32 %v69, 4294901760
    %v1179 = vsub.f32 %v69, %v1178
    %v1180 = vand.u32 %v1179, 4294901760
    %1181 = vmatpush1.msra.mxu0 %v1180
    %1182 = vmatprep.subr.mxu0 0.0
    %v1183 = vand.u32 %v70, 4294901760
    %v1184 = vsub.f32 %v70, %v1183
    %v1185 = vand.u32 %v1184, 4294901760
    %1186 = vmatpush1.msra.mxu0 %v1185
    %1187 = vmatprep.subr.mxu0 0.0
    %v1188 = vand.u32 %v71, 4294901760
    %v1189 = vsub.f32 %v71, %v1188
    %v1190 = vand.u32 %v1189, 4294901760
    %1191 = vmatpush1.msra.mxu0 %v1190
    %1192 = vmatprep.subr.mxu0 0.0
    %v1193 = vand.u32 %v72, 4294901760
    %v1194 = vsub.f32 %v72, %v1193
    %v1195 = vand.u32 %v1194, 4294901760
    %1196 = vmatpush1.msra.mxu0 %v1195
    %1197 = vmatprep.subr.mxu0 0.0
    %v1198 = vand.u32 %v73, 4294901760
    %v1199 = vsub.f32 %v73, %v1198
    %v1200 = vand.u32 %v1199, 4294901760
    %1201 = vmatpush1.msra.mxu0 %v1200
    %1202 = vmatprep.subr.mxu0 0.0
    %v1203 = vand.u32 %v74, 4294901760
    %v1204 = vsub.f32 %v74, %v1203
    %v1205 = vand.u32 %v1204, 4294901760
    %1206 = vmatpush1.msra.mxu0 %v1205
    %1207 = vmatprep.subr.mxu0 0.0
    %v1208 = vand.u32 %v75, 4294901760
    %v1209 = vsub.f32 %v75, %v1208
    %v1210 = vand.u32 %v1209, 4294901760
    %1211 = vmatpush1.msra.mxu0 %v1210
    %1212 = vmatprep.subr.mxu0 0.0
    %v1213 = vand.u32 %v76, 4294901760
    %v1214 = vsub.f32 %v76, %v1213
    %v1215 = vand.u32 %v1214, 4294901760
    %1216 = vmatpush1.msra.mxu0 %v1215
    %1217 = vmatprep.subr.mxu0 0.0
    %v1218 = vand.u32 %v77, 4294901760
    %v1219 = vsub.f32 %v77, %v1218
    %v1220 = vand.u32 %v1219, 4294901760
    %1221 = vmatpush1.msra.mxu0 %v1220
    %1222 = vmatprep.subr.mxu0 0.0
    %v1223 = vand.u32 %v78, 4294901760
    %v1224 = vsub.f32 %v78, %v1223
    %v1225 = vand.u32 %v1224, 4294901760
    %1226 = vmatpush1.msra.mxu0 %v1225
    %1227 = vmatprep.subr.mxu0 0.0
    %v1228 = vand.u32 %v79, 4294901760
    %v1229 = vsub.f32 %v79, %v1228
    %v1230 = vand.u32 %v1229, 4294901760
    %1231 = vmatpush1.msra.mxu0 %v1230
    %1232 = vmatprep.subr.mxu0 0.0
    %v1233 = vand.u32 %v80, 4294901760
    %v1234 = vsub.f32 %v80, %v1233
    %v1235 = vand.u32 %v1234, 4294901760
    %1236 = vmatpush1.msra.mxu0 %v1235
    %1237 = vmatprep.subr.mxu0 0.0
    %v1238 = vand.u32 %v81, 4294901760
    %v1239 = vsub.f32 %v81, %v1238
    %v1240 = vand.u32 %v1239, 4294901760
    %1241 = vmatpush1.msra.mxu0 %v1240
    %1242 = vmatprep.subr.mxu0 0.0
    %v1243 = vand.u32 %v82, 4294901760
    %v1244 = vsub.f32 %v82, %v1243
    %v1245 = vand.u32 %v1244, 4294901760
    %1246 = vmatpush1.msra.mxu0 %v1245
    %1247 = vmatprep.subr.mxu0 0.0
    %v1248 = vand.u32 %v83, 4294901760
    %v1249 = vsub.f32 %v83, %v1248
    %v1250 = vand.u32 %v1249, 4294901760
    %1251 = vmatpush1.msra.mxu0 %v1250
    %1252 = vmatprep.subr.mxu0 0.0
    %v1253 = vand.u32 %v84, 4294901760
    %v1254 = vsub.f32 %v84, %v1253
    %v1255 = vand.u32 %v1254, 4294901760
    %1256 = vmatpush1.msra.mxu0 %v1255
    %1257 = vmatprep.subr.mxu0 0.0
    %1258 = vmatpush1.msra.mxu0 0.0
    %1259 = vmatprep.subr.mxu0 0.0
    %1260 = vmatpush1.msra.mxu0 0.0
    %1261 = vmatprep.subr.mxu0 0.0
    %1262 = vmatpush1.msra.mxu0 0.0
    %1263 = vmatprep.subr.mxu0 0.0
    %1264 = vmatpush1.msra.mxu0 0.0
    %1265 = vmatprep.subr.mxu0 0.0
    %1266 = vmatpush1.msra.mxu0 0.0
    %1267 = vmatprep.subr.mxu0 0.0
    %1268 = vmatpush1.msra.mxu0 0.0
    %1269 = vmatprep.subr.mxu0 0.0
    %1270 = vmatpush1.msra.mxu0 0.0
    %1271 = vmatprep.subr.mxu0 0.0
    %1272 = vmatpush1.msra.mxu0 0.0
    %1273 = vmatprep.subr.mxu0 0.0
    %1274 = vmatpush1.msra.mxu0 0.0
    %1275 = vmatprep.subr.mxu0 0.0
    %1276 = vmatpush1.msra.mxu0 0.0
    %1277 = vmatprep.subr.mxu0 0.0
    %1278 = vmatpush1.msra.mxu0 0.0
    %1279 = vmatprep.subr.mxu0 0.0
    %1280 = vmatpush1.msra.mxu0 0.0
    %1281 = vmatprep.subr.mxu0 0.0
    %1282 = vmatpush1.msra.mxu0 0.0
    %1283 = vmatprep.subr.mxu0 0.0
    %1284 = vmatpush1.msra.mxu0 0.0
    %1285 = vmatprep.subr.mxu0 0.0
    %1286 = vmatpush1.msra.mxu0 0.0
    %1287 = vmatprep.subr.mxu0 0.0
    %1288 = vmatpush1.msra.mxu0 0.0
    %1289 = vmatprep.mubr.f32.mxu0 0.0
    %v1290 = vand.u32 %v58, 4294901760
    %1291 = vmatmul.mubr.f32.gmra.mrb[0].mxu0 %v1290
    %v1292 = vpop.f32.mrb[0].mxu0
    %v1293 = vadd.f32 %v1174, %v1292
    %v1294 = vpop.f32.mrb[0].mxu0
    %1295 = vdwg.mxu0
    %1296 = vmatprep.subr.mxu0 0.0
    %v1297 = vand.u32 %v69, 4294901760
    %1298 = vmatpush1.msra.mxu0 %v1297
    %1299 = vmatprep.subr.mxu0 0.0
    %v1300 = vand.u32 %v70, 4294901760
    %1301 = vmatpush1.msra.mxu0 %v1300
    %1302 = vmatprep.subr.mxu0 0.0
    %v1303 = vand.u32 %v71, 4294901760
    %1304 = vmatpush1.msra.mxu0 %v1303
    %1305 = vmatprep.subr.mxu0 0.0
    %v1306 = vand.u32 %v72, 4294901760
    %1307 = vmatpush1.msra.mxu0 %v1306
    %1308 = vmatprep.subr.mxu0 0.0
    %v1309 = vand.u32 %v73, 4294901760
    %1310 = vmatpush1.msra.mxu0 %v1309
    %1311 = vmatprep.subr.mxu0 0.0
    %v1312 = vand.u32 %v74, 4294901760
    %1313 = vmatpush1.msra.mxu0 %v1312
    %1314 = vmatprep.subr.mxu0 0.0
    %v1315 = vand.u32 %v75, 4294901760
    %1316 = vmatpush1.msra.mxu0 %v1315
    %1317 = vmatprep.subr.mxu0 0.0
    %v1318 = vand.u32 %v76, 4294901760
    %1319 = vmatpush1.msra.mxu0 %v1318
    %1320 = vmatprep.subr.mxu0 0.0
    %v1321 = vand.u32 %v77, 4294901760
    %1322 = vmatpush1.msra.mxu0 %v1321
    %1323 = vmatprep.subr.mxu0 0.0
    %v1324 = vand.u32 %v78, 4294901760
    %1325 = vmatpush1.msra.mxu0 %v1324
    %1326 = vmatprep.subr.mxu0 0.0
    %v1327 = vand.u32 %v79, 4294901760
    %1328 = vmatpush1.msra.mxu0 %v1327
    %1329 = vmatprep.subr.mxu0 0.0
    %v1330 = vand.u32 %v80, 4294901760
    %1331 = vmatpush1.msra.mxu0 %v1330
    %1332 = vmatprep.subr.mxu0 0.0
    %v1333 = vand.u32 %v81, 4294901760
    %1334 = vmatpush1.msra.mxu0 %v1333
    %1335 = vmatprep.subr.mxu0 0.0
    %v1336 = vand.u32 %v82, 4294901760
    %1337 = vmatpush1.msra.mxu0 %v1336
    %1338 = vmatprep.subr.mxu0 0.0
    %v1339 = vand.u32 %v83, 4294901760
    %1340 = vmatpush1.msra.mxu0 %v1339
    %1341 = vmatprep.subr.mxu0 0.0
    %v1342 = vand.u32 %v84, 4294901760
    %1343 = vmatpush1.msra.mxu0 %v1342
    %1344 = vmatprep.subr.mxu0 0.0
    %1345 = vmatpush1.msra.mxu0 0.0
    %1346 = vmatprep.subr.mxu0 0.0
    %1347 = vmatpush1.msra.mxu0 0.0
    %1348 = vmatprep.subr.mxu0 0.0
    %1349 = vmatpush1.msra.mxu0 0.0
    %1350 = vmatprep.subr.mxu0 0.0
    %1351 = vmatpush1.msra.mxu0 0.0
    %1352 = vmatprep.subr.mxu0 0.0
    %1353 = vmatpush1.msra.mxu0 0.0
    %1354 = vmatprep.subr.mxu0 0.0
    %1355 = vmatpush1.msra.mxu0 0.0
    %1356 = vmatprep.subr.mxu0 0.0
    %1357 = vmatpush1.msra.mxu0 0.0
    %1358 = vmatprep.subr.mxu0 0.0
    %1359 = vmatpush1.msra.mxu0 0.0
    %1360 = vmatprep.subr.mxu0 0.0
    %1361 = vmatpush1.msra.mxu0 0.0
    %1362 = vmatprep.subr.mxu0 0.0
    %1363 = vmatpush1.msra.mxu0 0.0
    %1364 = vmatprep.subr.mxu0 0.0
    %1365 = vmatpush1.msra.mxu0 0.0
    %1366 = vmatprep.subr.mxu0 0.0
    %1367 = vmatpush1.msra.mxu0 0.0
    %1368 = vmatprep.subr.mxu0 0.0
    %1369 = vmatpush1.msra.mxu0 0.0
    %1370 = vmatprep.subr.mxu0 0.0
    %1371 = vmatpush1.msra.mxu0 0.0
    %1372 = vmatprep.subr.mxu0 0.0
    %1373 = vmatpush1.msra.mxu0 0.0
    %1374 = vmatprep.subr.mxu0 0.0
    %1375 = vmatpush1.msra.mxu0 0.0
    %1376 = vmatprep.mubr.f32.mxu0 0.0
    %v1377 = vand.u32 %v58, 4294901760
    %1378 = vmatmul.mubr.f32.gmra.mrb[0].mxu0 %v1377
    %v1379 = vpop.f32.mrb[0].mxu0
    %v1380 = vadd.f32 %v1293, %v1379
    %v1381 = vpop.f32.mrb[0].mxu0
    %1382 = vdwg.mxu0
    %v1383 = vld [vmem:[%s6] sm:$0x1]
    %v1385 = vlaneseq
    %v1386 = vshrl.u32 %v1385, 7
    %v1387 = vsub.s32 0, %v1386
    %v1388 = vrot.slane %v1383, %v1387
    %v1390 = vadd.f32 %v1380, %v1388
    %v1391 = vmax.f32 %v1390, 0.0
    %1392 = vst [vmem:[#allocation6] sm:$0xff] %v1391
    // Predicated region
    $region33: #{mrconv.1} parent=1 // pred_check
      _
    $region34: #{mrconv.1} parent=1 // pred_check_branch
      %1394 = sbr.rel (0) target = $region36
    $region35: #{mrconv.1} parent=1 // pred_region
      %s1396 = ssub.s32 128, 128
      %1397 = vsyncadd [#allocation7], %s1396
      %s1399 = sshll.u32 [#allocation6], 4
      %s1400 = int_to_ptr.vmem [resolvable:$true] %s1399
      %1402 = dma.vmem_to_hbm [thread:$0]  %s1400, 128, %s7, [#allocation7]
    $region36: #{mrconv.1} parent=1 // pred_fallthru
      _
    // Predicated region
    $region37: #{mrconv.1} parent=1 // pred_check
      _
    $region38: #{mrconv.1} parent=1 // pred_check_branch
      %1404 = sbr.rel (0) target = $region40
    $region39: #{mrconv.1} parent=1 // pred_region
      %1405 = dma.done [#allocation7], 128
    $region40: #{mrconv.1} parent=1 // pred_fallthru
      _
    %1406 = vsyncpa [#allocation7], 1

</llo_original>
